<compile_context>
chip_gen: v7x
topology: tpu7x:2x2x1
jax: 0.10.0
libtpu: 0.0.40
codegen_flags: <defaults>
</compile_context>

<pallas_src>
import functools

import jax
import jax.numpy as jnp
from jax.experimental import pallas as pl
from jax.experimental.pallas import tpu as pltpu


LANE = 128


def _softshrink(y, lambd):
    # softshrink(y) = y - lambd (y > lambd) ; y + lambd (y < -lambd) ; 0 else
    #               = y - clip(y, -lambd, lambd)
    return y - jnp.clip(y, -lambd, lambd)


def _fused_mlp_kernel(x_ref, w1_ref, b1_ref, b2_ref, b3_ref, b4_ref,
                      w234_hbm, o_ref, w234_buf, sem, *, lambd):
    # Single HBM->VMEM DMA for all later-layer weights; overlaps with the
    # layer-1 matmul (one descriptor, one wait).
    cp = pltpu.make_async_copy(w234_hbm, w234_buf, sem)
    cp.start()

    n2 = b2_ref.shape[1]  # static slab column widths
    n3 = b3_ref.shape[1]
    n4 = b4_ref.shape[1]

    # Layer 1: [B, 784] @ [784, 256]  (bf16 operands, f32 accumulation)
    h = jnp.dot(x_ref[...].astype(jnp.bfloat16), w1_ref[...],
                preferred_element_type=jnp.float32)
    h = _softshrink(h + b1_ref[...], lambd)

    cp.wait()

    # Layer 2: [B, 256] @ [256, 256]
    h = jnp.dot(h.astype(jnp.bfloat16), w234_buf[:, 0:n2],
                preferred_element_type=jnp.float32)
    h = _softshrink(h + b2_ref[...], lambd)

    # Layer 3: [B, 256] @ [256, 256]
    h = jnp.dot(h.astype(jnp.bfloat16), w234_buf[:, n2:n2 + n3],
                preferred_element_type=jnp.float32)
    h = _softshrink(h + b3_ref[...], lambd)

    # Layer 4 (no activation): [B, 256] @ [256, 128] (output padded 10 -> 128)
    y = jnp.dot(h.astype(jnp.bfloat16), w234_buf[:, n2 + n3:n2 + n3 + n4],
                preferred_element_type=jnp.float32) + b4_ref[...]
    o_ref[...] = y.astype(o_ref.dtype)


def fused_mlp(x, prepared, *, lambd=0.5):
    """One fused Pallas call for the whole 4-layer MLP.

    x: [B, 784] f32.  prepared: (w1, b1, b2, b3, b4, w234) with w1 [784,256]
    bf16, biases [1, N] f32 (b4 N-padded to 128), and w234 the [256, 640]
    bf16 concatenation of layers 2..4 weights (layer-4 N-padded).
    """
    w1, b1, b2, b3, b4, w234 = prepared
    B, K = x.shape
    assert K == w1.shape[0]
    n_out = b4.shape[1]

    kernel = functools.partial(_fused_mlp_kernel, lambd=lambd)
    full = lambda shape: pl.BlockSpec(shape, lambda: (0,) * len(shape))

    flops = 2 * B * (K * w1.shape[1] + w234.shape[0] * w234.shape[1])
    bytes_accessed = sum(int(a.size) * a.dtype.itemsize
                         for a in (x, w1, b1, b2, b3, b4, w234))
    bytes_accessed += B * n_out * x.dtype.itemsize

    return pl.pallas_call(
        kernel,
        out_shape=jax.ShapeDtypeStruct((B, n_out), x.dtype),
        in_specs=[
            full((B, K)),                        # x (auto-DMA to VMEM)
            full(w1.shape),                      # w1
            full(b1.shape),                      # b1
            full(b2.shape),                      # b2
            full(b3.shape),                      # b3
            full(b4.shape),                      # b4 (padded)
            pl.BlockSpec(memory_space=pl.ANY),   # w2|w3|w4 slab stays in HBM
        ],
        out_specs=full((B, n_out)),
        scratch_shapes=[
            pltpu.VMEM(w234.shape, w234.dtype),  # slab landing buffer
            pltpu.SemaphoreType.DMA(()),
        ],
        cost_estimate=pl.CostEstimate(flops=flops, transcendentals=0,
                                      bytes_accessed=bytes_accessed),
    )(x, w1, b1, b2, b3, b4, w234)


def init_params(key, input_size=784, lin1=256, lin2=256, lin3=256, out=10,
                dtype=jnp.float32):
    """Deterministic PyTorch-style uniform(-1/sqrt(fan_in), 1/sqrt(fan_in)) init."""
    sizes = [(input_size, lin1), (lin1, lin2), (lin2, lin3), (lin3, out)]
    params = []
    for i, (fan_in, fan_out) in enumerate(sizes):
        kw, kb = jax.random.split(jax.random.fold_in(key, i))
        bound = 1.0 / (fan_in ** 0.5)
        w = jax.random.uniform(kw, (fan_in, fan_out), dtype, -bound, bound)
        b = jax.random.uniform(kb, (fan_out,), dtype, -bound, bound)
        params.append((w, b))
    return params


def _round_up(n, m):
    return ((n + m - 1) // m) * m


def prepare_params(params, weight_dtype=jnp.bfloat16):
    """One-time padding / bf16 cast / slab concat of parameters for the kernel."""
    (w1, b1), (w2, b2), (w3, b3), (w4, b4) = params
    out_features = w4.shape[1]

    # Pad the final output dim to a lane-dense width (10 -> 128).
    n_pad = _round_up(out_features, LANE)
    w4p = jnp.pad(w4, ((0, 0), (0, n_pad - out_features)))
    b4p = jnp.pad(b4, (0, n_pad - out_features))

    # Layers 2..4 share fan_in (256) -> one HBM slab, one in-kernel DMA.
    assert w2.shape[0] == w3.shape[0] == w4p.shape[0], (
        "slab concat assumes lin1_size == lin2_size == lin3_size")
    w234 = jnp.concatenate([w2, w3, w4p], axis=1).astype(weight_dtype)

    prepared = (w1.astype(weight_dtype),
                b1.reshape(1, -1).astype(jnp.float32),
                b2.reshape(1, -1).astype(jnp.float32),
                b3.reshape(1, -1).astype(jnp.float32),
                b4p.reshape(1, -1).astype(jnp.float32),
                w234)
    return prepared, out_features


def make_model(params, lambd=0.5):
    """Returns a jitted forward(x) for the whole model, fused into one kernel."""
    prepared, out_features = prepare_params(params)

    @jax.jit
    def forward(x):
        y = fused_mlp(x, prepared, lambd=lambd)
        return y[:, :out_features]

    return forward


def _reference_f32(x, params, lambd=0.5):
    """Plain f32 reference (PyTorch semantics)."""
    h = x
    for i, (w, b) in enumerate(params):
        h = h @ w + b
        if i < len(params) - 1:
            h = h - jnp.clip(h, -lambd, lambd)
    return h


def _reference_bf16(x, params, lambd=0.5):
    """Precision-matched reference: bf16 dot inputs, f32 accumulate/elementwise."""
    h = x
    for i, (w, b) in enumerate(params):
        hb = h.astype(jnp.bfloat16).astype(jnp.float32)
        wb = w.astype(jnp.bfloat16).astype(jnp.float32)
        h = jnp.dot(hb, wb, preferred_element_type=jnp.float32) + b
        if i < len(params) - 1:
            h = h - jnp.clip(h, -lambd, lambd)
    return h


if __name__ == "__main__":
    key = jax.random.PRNGKey(0)
    kx, kp = jax.random.split(key)

    batch = 8
    input_size = 784
    x = jax.random.normal(kx, (batch, input_size), jnp.float32)

    params = init_params(kp, input_size=input_size)
    model = make_model(params, lambd=0.5)

    out = jax.block_until_ready(model(x))
    assert out.shape == (batch, 10), out.shape

    ref_matched = _reference_bf16(x, params)   # same precision as the kernel
    ref_f32 = _reference_f32(x, params)        # full-f32 PyTorch semantics
    assert jnp.allclose(out, ref_matched, atol=1e-3, rtol=1e-3), \
        "mismatch vs precision-matched reference"
    assert jnp.allclose(out, ref_f32, atol=5e-2, rtol=5e-2), \
        "mismatch vs f32 reference"

    print("KERNEL_OK")
</pallas_src>

<mosaic_0001>
module attributes {stable_mosaic.version = 11 : i64} {
  func.func @_fused_mlp_kernel(%arg0: memref<8x784xf32, #tpu.memory_space<vmem>>, %arg1: memref<784x256xbf16, #tpu.memory_space<vmem>>, %arg2: memref<1x256xf32, #tpu.memory_space<vmem>>, %arg3: memref<1x256xf32, #tpu.memory_space<vmem>>, %arg4: memref<1x256xf32, #tpu.memory_space<vmem>>, %arg5: memref<1x128xf32, #tpu.memory_space<vmem>>, %arg6: memref<256x640xbf16, #tpu.memory_space<any>>, %arg7: memref<8x128xf32, #tpu.memory_space<vmem>>, %arg8: memref<256x640xbf16, #tpu.memory_space<vmem>>, %arg9: memref<!tpu.dma_semaphore, #tpu.memory_space<semaphore_mem>>) attributes {dimension_semantics = [], scalar_prefetch = 0 : i64, scratch_operands = 2 : i64, tpu.core_type = #tpu.core_type<tc>} {
    tpu.enqueue_dma source(%arg6 : memref<256x640xbf16, #tpu.memory_space<any>>) target(%arg8 : memref<256x640xbf16, #tpu.memory_space<vmem>>) target_semaphore(%arg9 : memref<!tpu.dma_semaphore, #tpu.memory_space<semaphore_mem>>)
    %c0 = arith.constant 0 : index
    %c0_0 = arith.constant 0 : index
    %0 = vector.load %arg0[%c0, %c0_0] : memref<8x784xf32, #tpu.memory_space<vmem>>, vector<8x784xf32>
    %1 = arith.truncf %0 : vector<8x784xf32> to vector<8x784xbf16>
    %c0_1 = arith.constant 0 : index
    %c0_2 = arith.constant 0 : index
    %2 = vector.load %arg1[%c0_1, %c0_2] : memref<784x256xbf16, #tpu.memory_space<vmem>>, vector<784x256xbf16>
    %cst = arith.constant dense<0.000000e+00> : vector<8x256xf32>
    %3 = tpu.matmul %1, %2, %cst {dimension_numbers = #tpu.dot_dimension_numbers<[1], [0], [0], [1], [0, 0, 1, 1], [], []>} : vector<8x784xbf16>, vector<784x256xbf16>, vector<8x256xf32> -> vector<8x256xf32>
    %c0_3 = arith.constant 0 : index
    %c0_4 = arith.constant 0 : index
    %4 = vector.load %arg2[%c0_3, %c0_4] : memref<1x256xf32, #tpu.memory_space<vmem>>, vector<1x256xf32>
    %5 = vector.broadcast %4 : vector<1x256xf32> to vector<8x256xf32>
    %6 = arith.addf %3, %5 : vector<8x256xf32>
    %cst_5 = arith.constant -5.000000e-01 : f32
    %cst_6 = arith.constant 5.000000e-01 : f32
    %7 = vector.broadcast %cst_5 : f32 to vector<8x256xf32>
    %8 = arith.maximumf %7, %6 : vector<8x256xf32>
    %9 = vector.broadcast %cst_6 : f32 to vector<8x256xf32>
    %10 = arith.minimumf %9, %8 : vector<8x256xf32>
    %11 = arith.subf %6, %10 : vector<8x256xf32>
    tpu.wait_dma2 semaphore(%arg9 : memref<!tpu.dma_semaphore, #tpu.memory_space<semaphore_mem>>) src(%arg6 : memref<256x640xbf16, #tpu.memory_space<any>>) dst(%arg8 : memref<256x640xbf16, #tpu.memory_space<vmem>>)
    %12 = arith.truncf %11 : vector<8x256xf32> to vector<8x256xbf16>
    %c0_7 = arith.constant 0 : index
    %c0_8 = arith.constant 0 : index
    %13 = vector.load %arg8[%c0_7, %c0_8] : memref<256x640xbf16, #tpu.memory_space<vmem>>, vector<256x256xbf16>
    %cst_9 = arith.constant dense<0.000000e+00> : vector<8x256xf32>
    %14 = tpu.matmul %12, %13, %cst_9 {dimension_numbers = #tpu.dot_dimension_numbers<[1], [0], [0], [1], [0, 0, 1, 1], [], []>} : vector<8x256xbf16>, vector<256x256xbf16>, vector<8x256xf32> -> vector<8x256xf32>
    %c0_10 = arith.constant 0 : index
    %c0_11 = arith.constant 0 : index
    %15 = vector.load %arg3[%c0_10, %c0_11] : memref<1x256xf32, #tpu.memory_space<vmem>>, vector<1x256xf32>
    %16 = vector.broadcast %15 : vector<1x256xf32> to vector<8x256xf32>
    %17 = arith.addf %14, %16 : vector<8x256xf32>
    %cst_12 = arith.constant -5.000000e-01 : f32
    %cst_13 = arith.constant 5.000000e-01 : f32
    %18 = vector.broadcast %cst_12 : f32 to vector<8x256xf32>
    %19 = arith.maximumf %18, %17 : vector<8x256xf32>
    %20 = vector.broadcast %cst_13 : f32 to vector<8x256xf32>
    %21 = arith.minimumf %20, %19 : vector<8x256xf32>
    %22 = arith.subf %17, %21 : vector<8x256xf32>
    %23 = arith.truncf %22 : vector<8x256xf32> to vector<8x256xbf16>
    %c0_14 = arith.constant 0 : index
    %c256 = arith.constant 256 : index
    %24 = vector.load %arg8[%c0_14, %c256] : memref<256x640xbf16, #tpu.memory_space<vmem>>, vector<256x256xbf16>
    %cst_15 = arith.constant dense<0.000000e+00> : vector<8x256xf32>
    %25 = tpu.matmul %23, %24, %cst_15 {dimension_numbers = #tpu.dot_dimension_numbers<[1], [0], [0], [1], [0, 0, 1, 1], [], []>} : vector<8x256xbf16>, vector<256x256xbf16>, vector<8x256xf32> -> vector<8x256xf32>
    %c0_16 = arith.constant 0 : index
    %c0_17 = arith.constant 0 : index
    %26 = vector.load %arg4[%c0_16, %c0_17] : memref<1x256xf32, #tpu.memory_space<vmem>>, vector<1x256xf32>
    %27 = vector.broadcast %26 : vector<1x256xf32> to vector<8x256xf32>
    %28 = arith.addf %25, %27 : vector<8x256xf32>
    %cst_18 = arith.constant -5.000000e-01 : f32
    %cst_19 = arith.constant 5.000000e-01 : f32
    %29 = vector.broadcast %cst_18 : f32 to vector<8x256xf32>
    %30 = arith.maximumf %29, %28 : vector<8x256xf32>
    %31 = vector.broadcast %cst_19 : f32 to vector<8x256xf32>
    %32 = arith.minimumf %31, %30 : vector<8x256xf32>
    %33 = arith.subf %28, %32 : vector<8x256xf32>
    %34 = arith.truncf %33 : vector<8x256xf32> to vector<8x256xbf16>
    %c0_20 = arith.constant 0 : index
    %c512 = arith.constant 512 : index
    %35 = vector.load %arg8[%c0_20, %c512] : memref<256x640xbf16, #tpu.memory_space<vmem>>, vector<256x128xbf16>
    %cst_21 = arith.constant dense<0.000000e+00> : vector<8x128xf32>
    %36 = tpu.matmul %34, %35, %cst_21 {dimension_numbers = #tpu.dot_dimension_numbers<[1], [0], [0], [1], [0, 0, 1, 1], [], []>} : vector<8x256xbf16>, vector<256x128xbf16>, vector<8x128xf32> -> vector<8x128xf32>
    %c0_22 = arith.constant 0 : index
    %c0_23 = arith.constant 0 : index
    %37 = vector.load %arg5[%c0_22, %c0_23] : memref<1x128xf32, #tpu.memory_space<vmem>>, vector<1x128xf32>
    %38 = vector.broadcast %37 : vector<1x128xf32> to vector<8x128xf32>
    %39 = arith.addf %36, %38 : vector<8x128xf32>
    %c0_24 = arith.constant 0 : index
    %c0_25 = arith.constant 0 : index
    %40 = vector.load %arg7[%c0_24, %c0_25] : memref<8x128xf32, #tpu.memory_space<vmem>>, vector<8x128xf32>
    tpu.vector_store %arg7[%c0_24, %c0_25], %39 {strides = array<i32>} : memref<8x128xf32, #tpu.memory_space<vmem>>, vector<8x128xf32>,
    return
  }
}

</mosaic_0001>

<llo_original>
// kernel: forward.1
$region0: #{forward.1}
  #allocation0 [shape = 'u32[]', space=smem, size = 0x4, offset = 0x4, fixed_abs, tag = 'smem constant byte address 0x4 - core index']
  #allocation1 [shape = 'u32[144,128]{1,0:T(1,128)}', space=vmem, size = 0x12000, scoped, tag = 'internal scratch']
  #allocation2 [shape = 'bf16[256,640]{1,0:T(16,128)(2,1)}', space=vmem, size = 0x50000, scoped, tag = 'scratch operand']
  #allocation3 [shape = 's32[1]{0}', space=sflag, size = 0x4, scoped, tag = 'scratch operand']
  #allocation6 [shape = 's32[]', space=sflag, size = 0x4, offset = 0, fixed_abs, tag = 'sflag constant byte address 0x0 - dummy sync flag']
  %s0 = inlined_call_operand.vmem [shape: f32[8,784], index: 0, kind: input, shape index: {}]
  %s1 = inlined_call_operand.vmem [shape: bf16[784,256], index: 1, kind: input, shape index: {}]
  %s2 = inlined_call_operand.vmem [shape: f32[1,256], index: 2, kind: input, shape index: {}]
  %s3 = inlined_call_operand.vmem [shape: f32[1,256], index: 3, kind: input, shape index: {}]
  %s4 = inlined_call_operand.vmem [shape: f32[1,256], index: 4, kind: input, shape index: {}]
  %s5 = inlined_call_operand.vmem [shape: f32[1,128], index: 5, kind: input, shape index: {}]
  %s6 = inlined_call_operand.vmem [shape: bf16[256,640], index: 6, kind: input, shape index: {}]
  %s7 = inlined_call_operand.hbm [shape: f32[8,128], index: 7, kind: output, shape index: {}]
  %s8 = sld [smem:[#allocation0]]
  $region71: #{forward.1} parent=0
    _
  %s10 = ssub.s32 1, %s8
  %s11 = scalar_select 0, %s10, %s8
  $region1: #{forward.1} parent=0
    #allocation4 [shape = 'u8[4096]{0}', space=vmem, size = 0x1000, scoped, tag = 'output window, operand 0, single buffered']
    #allocation5 [shape = 's32[1]{0}', space=sflag, size = 0x4, scoped, tag = 'scoped memory for forward.1']
    %12 = vsyncpa [#allocation5], 0
    // Predicated region
    $region2: #{forward.1} parent=1 // pred_check
      _
    $region3: #{forward.1} parent=1 // pred_check_branch
      %14 = sbr.rel (0) target = $region5
    $region4: #{forward.1} parent=1 // pred_region
      _
    $region5: #{forward.1} parent=1 // pred_fallthru
      _
    // Predicated region
    $region6: #{forward.1} parent=1 // pred_check
      _
    $region7: #{forward.1} parent=1 // pred_check_branch
      %16 = sbr.rel (0) target = $region9
    $region8: #{forward.1} parent=1 // pred_region
      _
    $region9: #{forward.1} parent=1 // pred_fallthru
      _
    // Predicated region
    $region10: #{forward.1} parent=1 // pred_check
      _
    $region11: #{forward.1} parent=1 // pred_check_branch
      %18 = sbr.rel (0) target = $region13
    $region12: #{forward.1} parent=1 // pred_region
      _
    $region13: #{forward.1} parent=1 // pred_fallthru
      _
    // Predicated region
    $region14: #{forward.1} parent=1 // pred_check
      _
    $region15: #{forward.1} parent=1 // pred_check_branch
      %20 = sbr.rel (0) target = $region17
    $region16: #{forward.1} parent=1 // pred_region
      _
    $region17: #{forward.1} parent=1 // pred_fallthru
      _
    // Predicated region
    $region18: #{forward.1} parent=1 // pred_check
      _
    $region19: #{forward.1} parent=1 // pred_check_branch
      %22 = sbr.rel (0) target = $region21
    $region20: #{forward.1} parent=1 // pred_region
      _
    $region21: #{forward.1} parent=1 // pred_fallthru
      _
    // Predicated region
    $region22: #{forward.1} parent=1 // pred_check
      _
    $region23: #{forward.1} parent=1 // pred_check_branch
      %24 = sbr.rel (0) target = $region25
    $region24: #{forward.1} parent=1 // pred_region
      _
    $region25: #{forward.1} parent=1 // pred_fallthru
      _
    %p27 = scmp.lt.u32.totalorder 4, 8
    %p28 = pneg %p27
    // Predicated region
    $region26: #{forward.1} parent=1 // pred_check
      _
    $region27: #{forward.1} parent=1 // pred_check_branch
      %30 = sbr.rel (%p27) target = $region29
    $region28: #{forward.1} parent=1 // pred_region
      %s363 = sand.u32 4, 7
      %p364 = scmp.eq.s32.totalorder %s363, 0
      %p365 = pneg %p364
      // Predicated region
      $region41: #{forward.1} parent=28 // pred_check
        _
      $region42: #{forward.1} parent=28 // pred_check_branch
        %367 = sbr.rel (%p364) target = $region44
      $region43: #{forward.1} parent=28 // pred_region
        %s368 = sand.u32 4, 7
        %s369 = ssub.s32 4, %s368
        %s370 = scalar_lea.vmem %s6, %s369
        %s371 = ssub.s32 4, %s368
        %s372 = scalar_lea.vmem [#allocation2], %s371
        loop: start=0, step=1, limit=1
        $region45: #{forward.1} parent=43 // loop_pre_header
          _
        $region46: #{forward.1} parent=43 // loop_header
          %s374 = sphi 0, %s378
          %p375 = scmp.ge.s32.totalorder %s374, 1
          %s379 = sphi %s6, %s6
          %s380 = sphi [#allocation2], [#allocation2]
        $region47: #{forward.1} parent=43 // loop_header_branch
          %377 = sbr.rel (%p375) target = $region51
        $region48: #{forward.1} parent=43 // loop_body
          _
        $region49: #{forward.1} parent=43 // loop_footer
          %s378 = sadd.s32 1, %s374
        $region50: #{forward.1} parent=43 // loop_footer_branch
          %373 = sbr.rel target = $region46
        $region51: #{forward.1} parent=43 // loop_exit
          _
        %s381 = sshllo.u32 0, %s368
        loop: start=0, step=1, limit=1
        $region52: #{forward.1} parent=43 // loop_pre_header
          _
        $region53: #{forward.1} parent=43 // loop_header
          %s383 = sphi 0, %s387
          %p384 = scmp.ge.s32.totalorder %s383, 1
          %s388 = sphi %s370, %s370
          %s389 = sphi %s372, %s372
        $region54: #{forward.1} parent=43 // loop_header_branch
          %386 = sbr.rel (%p384) target = $region58
        $region55: #{forward.1} parent=43 // loop_body
          %v390 = vld [vmem:[%s388] sm:%s381]
          %391 = vst [vmem:[%s389] sm:%s381] %v390
          %v392 = vld [vmem:[%s388 + $0x14] sm:%s381]
          %393 = vst [vmem:[%s389 + $0x4] sm:%s381] %v392
          %v394 = vld [vmem:[%s388 + $0x4] sm:%s381]
          %395 = vst [vmem:[%s389 + $0x8] sm:%s381] %v394
          %v396 = vld [vmem:[%s388 + $0x18] sm:%s381]
          %397 = vst [vmem:[%s389 + $0xc] sm:%s381] %v396
          %v398 = vld [vmem:[%s388 + $0x8] sm:%s381]
          %399 = vst [vmem:[%s389 + $0x10] sm:%s381] %v398
          %v400 = vld [vmem:[%s388 + $0x1c] sm:%s381]
          %401 = vst [vmem:[%s389 + $0x14] sm:%s381] %v400
          %v402 = vld [vmem:[%s388 + $0xc] sm:%s381]
          %403 = vst [vmem:[%s389 + $0x18] sm:%s381] %v402
          %v404 = vld [vmem:[%s388 + $0x20] sm:%s381]
          %405 = vst [vmem:[%s389 + $0x1c] sm:%s381] %v404
          %v406 = vld [vmem:[%s388 + $0x10] sm:%s381]
          %407 = vst [vmem:[%s389 + $0x20] sm:%s381] %v406
          %v408 = vld [vmem:[%s388 + $0x24] sm:%s381]
          %409 = vst [vmem:[%s389 + $0x24] sm:%s381] %v408
          %v410 = vld [vmem:[%s388 + $0x28] sm:%s381]
          %411 = vst [vmem:[%s389 + $0x28] sm:%s381] %v410
          %v412 = vld [vmem:[%s388 + $0x3c] sm:%s381]
          %413 = vst [vmem:[%s389 + $0x2c] sm:%s381] %v412
          %v414 = vld [vmem:[%s388 + $0x2c] sm:%s381]
          %415 = vst [vmem:[%s389 + $0x30] sm:%s381] %v414
          %v416 = vld [vmem:[%s388 + $0x40] sm:%s381]
          %417 = vst [vmem:[%s389 + $0x34] sm:%s381] %v416
          %v418 = vld [vmem:[%s388 + $0x30] sm:%s381]
          %419 = vst [vmem:[%s389 + $0x38] sm:%s381] %v418
          %v420 = vld [vmem:[%s388 + $0x44] sm:%s381]
          %421 = vst [vmem:[%s389 + $0x3c] sm:%s381] %v420
          %v422 = vld [vmem:[%s388 + $0x34] sm:%s381]
          %423 = vst [vmem:[%s389 + $0x40] sm:%s381] %v422
          %v424 = vld [vmem:[%s388 + $0x48] sm:%s381]
          %425 = vst [vmem:[%s389 + $0x44] sm:%s381] %v424
          %v426 = vld [vmem:[%s388 + $0x38] sm:%s381]
          %427 = vst [vmem:[%s389 + $0x48] sm:%s381] %v426
          %v428 = vld [vmem:[%s388 + $0x4c] sm:%s381]
          %429 = vst [vmem:[%s389 + $0x4c] sm:%s381] %v428
          %v430 = vld [vmem:[%s388 + $0x50] sm:%s381]
          %431 = vst [vmem:[%s389 + $0x50] sm:%s381] %v430
          %v432 = vld [vmem:[%s388 + $0x64] sm:%s381]
          %433 = vst [vmem:[%s389 + $0x54] sm:%s381] %v432
          %v434 = vld [vmem:[%s388 + $0x54] sm:%s381]
          %435 = vst [vmem:[%s389 + $0x58] sm:%s381] %v434
          %v436 = vld [vmem:[%s388 + $0x68] sm:%s381]
          %437 = vst [vmem:[%s389 + $0x5c] sm:%s381] %v436
          %v438 = vld [vmem:[%s388 + $0x58] sm:%s381]
          %439 = vst [vmem:[%s389 + $0x60] sm:%s381] %v438
          %v440 = vld [vmem:[%s388 + $0x6c] sm:%s381]
          %441 = vst [vmem:[%s389 + $0x64] sm:%s381] %v440
          %v442 = vld [vmem:[%s388 + $0x5c] sm:%s381]
          %443 = vst [vmem:[%s389 + $0x68] sm:%s381] %v442
          %v444 = vld [vmem:[%s388 + $0x70] sm:%s381]
          %445 = vst [vmem:[%s389 + $0x6c] sm:%s381] %v444
          %v446 = vld [vmem:[%s388 + $0x60] sm:%s381]
          %447 = vst [vmem:[%s389 + $0x70] sm:%s381] %v446
          %v448 = vld [vmem:[%s388 + $0x74] sm:%s381]
          %449 = vst [vmem:[%s389 + $0x74] sm:%s381] %v448
          %v450 = vld [vmem:[%s388 + $0x78] sm:%s381]
          %451 = vst [vmem:[%s389 + $0x78] sm:%s381] %v450
          %v452 = vld [vmem:[%s388 + $0x8c] sm:%s381]
          %453 = vst [vmem:[%s389 + $0x7c] sm:%s381] %v452
          %v454 = vld [vmem:[%s388 + $0x7c] sm:%s381]
          %455 = vst [vmem:[%s389 + $0x80] sm:%s381] %v454
          %v456 = vld [vmem:[%s388 + $0x90] sm:%s381]
          %457 = vst [vmem:[%s389 + $0x84] sm:%s381] %v456
          %v458 = vld [vmem:[%s388 + $0x80] sm:%s381]
          %459 = vst [vmem:[%s389 + $0x88] sm:%s381] %v458
          %v460 = vld [vmem:[%s388 + $0x94] sm:%s381]
          %461 = vst [vmem:[%s389 + $0x8c] sm:%s381] %v460
          %v462 = vld [vmem:[%s388 + $0x84] sm:%s381]
          %463 = vst [vmem:[%s389 + $0x90] sm:%s381] %v462
          %v464 = vld [vmem:[%s388 + $0x98] sm:%s381]
          %465 = vst [vmem:[%s389 + $0x94] sm:%s381] %v464
          %v466 = vld [vmem:[%s388 + $0x88] sm:%s381]
          %467 = vst [vmem:[%s389 + $0x98] sm:%s381] %v466
          %v468 = vld [vmem:[%s388 + $0x9c] sm:%s381]
          %469 = vst [vmem:[%s389 + $0x9c] sm:%s381] %v468
          %v470 = vld [vmem:[%s388 + $0xa0] sm:%s381]
          %471 = vst [vmem:[%s389 + $0xa0] sm:%s381] %v470
          %v472 = vld [vmem:[%s388 + $0xb4] sm:%s381]
          %473 = vst [vmem:[%s389 + $0xa4] sm:%s381] %v472
          %v474 = vld [vmem:[%s388 + $0xa4] sm:%s381]
          %475 = vst [vmem:[%s389 + $0xa8] sm:%s381] %v474
          %v476 = vld [vmem:[%s388 + $0xb8] sm:%s381]
          %477 = vst [vmem:[%s389 + $0xac] sm:%s381] %v476
          %v478 = vld [vmem:[%s388 + $0xa8] sm:%s381]
          %479 = vst [vmem:[%s389 + $0xb0] sm:%s381] %v478
          %v480 = vld [vmem:[%s388 + $0xbc] sm:%s381]
          %481 = vst [vmem:[%s389 + $0xb4] sm:%s381] %v480
          %v482 = vld [vmem:[%s388 + $0xac] sm:%s381]
          %483 = vst [vmem:[%s389 + $0xb8] sm:%s381] %v482
          %v484 = vld [vmem:[%s388 + $0xc0] sm:%s381]
          %485 = vst [vmem:[%s389 + $0xbc] sm:%s381] %v484
          %v486 = vld [vmem:[%s388 + $0xb0] sm:%s381]
          %487 = vst [vmem:[%s389 + $0xc0] sm:%s381] %v486
          %v488 = vld [vmem:[%s388 + $0xc4] sm:%s381]
          %489 = vst [vmem:[%s389 + $0xc4] sm:%s381] %v488
          %v490 = vld [vmem:[%s388 + $0xc8] sm:%s381]
          %491 = vst [vmem:[%s389 + $0xc8] sm:%s381] %v490
          %v492 = vld [vmem:[%s388 + $0xdc] sm:%s381]
          %493 = vst [vmem:[%s389 + $0xcc] sm:%s381] %v492
          %v494 = vld [vmem:[%s388 + $0xcc] sm:%s381]
          %495 = vst [vmem:[%s389 + $0xd0] sm:%s381] %v494
          %v496 = vld [vmem:[%s388 + $0xe0] sm:%s381]
          %497 = vst [vmem:[%s389 + $0xd4] sm:%s381] %v496
          %v498 = vld [vmem:[%s388 + $0xd0] sm:%s381]
          %499 = vst [vmem:[%s389 + $0xd8] sm:%s381] %v498
          %v500 = vld [vmem:[%s388 + $0xe4] sm:%s381]
          %501 = vst [vmem:[%s389 + $0xdc] sm:%s381] %v500
          %v502 = vld [vmem:[%s388 + $0xd4] sm:%s381]
          %503 = vst [vmem:[%s389 + $0xe0] sm:%s381] %v502
          %v504 = vld [vmem:[%s388 + $0xe8] sm:%s381]
          %505 = vst [vmem:[%s389 + $0xe4] sm:%s381] %v504
          %v506 = vld [vmem:[%s388 + $0xd8] sm:%s381]
          %507 = vst [vmem:[%s389 + $0xe8] sm:%s381] %v506
          %v508 = vld [vmem:[%s388 + $0xec] sm:%s381]
          %509 = vst [vmem:[%s389 + $0xec] sm:%s381] %v508
          %v510 = vld [vmem:[%s388 + $0xf0] sm:%s381]
          %511 = vst [vmem:[%s389 + $0xf0] sm:%s381] %v510
          %v512 = vld [vmem:[%s388 + $0x104] sm:%s381]
          %513 = vst [vmem:[%s389 + $0xf4] sm:%s381] %v512
          %v514 = vld [vmem:[%s388 + $0xf4] sm:%s381]
          %515 = vst [vmem:[%s389 + $0xf8] sm:%s381] %v514
          %v516 = vld [vmem:[%s388 + $0x108] sm:%s381]
          %517 = vst [vmem:[%s389 + $0xfc] sm:%s381] %v516
          %v518 = vld [vmem:[%s388 + $0xf8] sm:%s381]
          %519 = vst [vmem:[%s389 + $0x100] sm:%s381] %v518
          %v520 = vld [vmem:[%s388 + $0x10c] sm:%s381]
          %521 = vst [vmem:[%s389 + $0x104] sm:%s381] %v520
          %v522 = vld [vmem:[%s388 + $0xfc] sm:%s381]
          %523 = vst [vmem:[%s389 + $0x108] sm:%s381] %v522
          %v524 = vld [vmem:[%s388 + $0x110] sm:%s381]
          %525 = vst [vmem:[%s389 + $0x10c] sm:%s381] %v524
          %v526 = vld [vmem:[%s388 + $0x100] sm:%s381]
          %527 = vst [vmem:[%s389 + $0x110] sm:%s381] %v526
          %v528 = vld [vmem:[%s388 + $0x114] sm:%s381]
          %529 = vst [vmem:[%s389 + $0x114] sm:%s381] %v528
          %v530 = vld [vmem:[%s388 + $0x118] sm:%s381]
          %531 = vst [vmem:[%s389 + $0x118] sm:%s381] %v530
          %v532 = vld [vmem:[%s388 + $0x12c] sm:%s381]
          %533 = vst [vmem:[%s389 + $0x11c] sm:%s381] %v532
          %v534 = vld [vmem:[%s388 + $0x11c] sm:%s381]
          %535 = vst [vmem:[%s389 + $0x120] sm:%s381] %v534
          %v536 = vld [vmem:[%s388 + $0x130] sm:%s381]
          %537 = vst [vmem:[%s389 + $0x124] sm:%s381] %v536
          %v538 = vld [vmem:[%s388 + $0x120] sm:%s381]
          %539 = vst [vmem:[%s389 + $0x128] sm:%s381] %v538
          %v540 = vld [vmem:[%s388 + $0x134] sm:%s381]
          %541 = vst [vmem:[%s389 + $0x12c] sm:%s381] %v540
          %v542 = vld [vmem:[%s388 + $0x124] sm:%s381]
          %543 = vst [vmem:[%s389 + $0x130] sm:%s381] %v542
          %v544 = vld [vmem:[%s388 + $0x138] sm:%s381]
          %545 = vst [vmem:[%s389 + $0x134] sm:%s381] %v544
          %v546 = vld [vmem:[%s388 + $0x128] sm:%s381]
          %547 = vst [vmem:[%s389 + $0x138] sm:%s381] %v546
          %v548 = vld [vmem:[%s388 + $0x13c] sm:%s381]
          %549 = vst [vmem:[%s389 + $0x13c] sm:%s381] %v548
          %v550 = vld [vmem:[%s388 + $0x140] sm:%s381]
          %551 = vst [vmem:[%s389 + $0x140] sm:%s381] %v550
          %v552 = vld [vmem:[%s388 + $0x154] sm:%s381]
          %553 = vst [vmem:[%s389 + $0x144] sm:%s381] %v552
          %v554 = vld [vmem:[%s388 + $0x144] sm:%s381]
          %555 = vst [vmem:[%s389 + $0x148] sm:%s381] %v554
          %v556 = vld [vmem:[%s388 + $0x158] sm:%s381]
          %557 = vst [vmem:[%s389 + $0x14c] sm:%s381] %v556
          %v558 = vld [vmem:[%s388 + $0x148] sm:%s381]
          %559 = vst [vmem:[%s389 + $0x150] sm:%s381] %v558
          %v560 = vld [vmem:[%s388 + $0x15c] sm:%s381]
          %561 = vst [vmem:[%s389 + $0x154] sm:%s381] %v560
          %v562 = vld [vmem:[%s388 + $0x14c] sm:%s381]
          %563 = vst [vmem:[%s389 + $0x158] sm:%s381] %v562
          %v564 = vld [vmem:[%s388 + $0x160] sm:%s381]
          %565 = vst [vmem:[%s389 + $0x15c] sm:%s381] %v564
          %v566 = vld [vmem:[%s388 + $0x150] sm:%s381]
          %567 = vst [vmem:[%s389 + $0x160] sm:%s381] %v566
          %v568 = vld [vmem:[%s388 + $0x164] sm:%s381]
          %569 = vst [vmem:[%s389 + $0x164] sm:%s381] %v568
          %v570 = vld [vmem:[%s388 + $0x168] sm:%s381]
          %571 = vst [vmem:[%s389 + $0x168] sm:%s381] %v570
          %v572 = vld [vmem:[%s388 + $0x17c] sm:%s381]
          %573 = vst [vmem:[%s389 + $0x16c] sm:%s381] %v572
          %v574 = vld [vmem:[%s388 + $0x16c] sm:%s381]
          %575 = vst [vmem:[%s389 + $0x170] sm:%s381] %v574
          %v576 = vld [vmem:[%s388 + $0x180] sm:%s381]
          %577 = vst [vmem:[%s389 + $0x174] sm:%s381] %v576
          %v578 = vld [vmem:[%s388 + $0x170] sm:%s381]
          %579 = vst [vmem:[%s389 + $0x178] sm:%s381] %v578
          %v580 = vld [vmem:[%s388 + $0x184] sm:%s381]
          %581 = vst [vmem:[%s389 + $0x17c] sm:%s381] %v580
          %v582 = vld [vmem:[%s388 + $0x174] sm:%s381]
          %583 = vst [vmem:[%s389 + $0x180] sm:%s381] %v582
          %v584 = vld [vmem:[%s388 + $0x188] sm:%s381]
          %585 = vst [vmem:[%s389 + $0x184] sm:%s381] %v584
          %v586 = vld [vmem:[%s388 + $0x178] sm:%s381]
          %587 = vst [vmem:[%s389 + $0x188] sm:%s381] %v586
          %v588 = vld [vmem:[%s388 + $0x18c] sm:%s381]
          %589 = vst [vmem:[%s389 + $0x18c] sm:%s381] %v588
          %v590 = vld [vmem:[%s388 + $0x190] sm:%s381]
          %591 = vst [vmem:[%s389 + $0x190] sm:%s381] %v590
          %v592 = vld [vmem:[%s388 + $0x1a4] sm:%s381]
          %593 = vst [vmem:[%s389 + $0x194] sm:%s381] %v592
          %v594 = vld [vmem:[%s388 + $0x194] sm:%s381]
          %595 = vst [vmem:[%s389 + $0x198] sm:%s381] %v594
          %v596 = vld [vmem:[%s388 + $0x1a8] sm:%s381]
          %597 = vst [vmem:[%s389 + $0x19c] sm:%s381] %v596
          %v598 = vld [vmem:[%s388 + $0x198] sm:%s381]
          %599 = vst [vmem:[%s389 + $0x1a0] sm:%s381] %v598
          %v600 = vld [vmem:[%s388 + $0x1ac] sm:%s381]
          %601 = vst [vmem:[%s389 + $0x1a4] sm:%s381] %v600
          %v602 = vld [vmem:[%s388 + $0x19c] sm:%s381]
          %603 = vst [vmem:[%s389 + $0x1a8] sm:%s381] %v602
          %v604 = vld [vmem:[%s388 + $0x1b0] sm:%s381]
          %605 = vst [vmem:[%s389 + $0x1ac] sm:%s381] %v604
          %v606 = vld [vmem:[%s388 + $0x1a0] sm:%s381]
          %607 = vst [vmem:[%s389 + $0x1b0] sm:%s381] %v606
          %v608 = vld [vmem:[%s388 + $0x1b4] sm:%s381]
          %609 = vst [vmem:[%s389 + $0x1b4] sm:%s381] %v608
          %v610 = vld [vmem:[%s388 + $0x1b8] sm:%s381]
          %611 = vst [vmem:[%s389 + $0x1b8] sm:%s381] %v610
          %v612 = vld [vmem:[%s388 + $0x1cc] sm:%s381]
          %613 = vst [vmem:[%s389 + $0x1bc] sm:%s381] %v612
          %v614 = vld [vmem:[%s388 + $0x1bc] sm:%s381]
          %615 = vst [vmem:[%s389 + $0x1c0] sm:%s381] %v614
          %v616 = vld [vmem:[%s388 + $0x1d0] sm:%s381]
          %617 = vst [vmem:[%s389 + $0x1c4] sm:%s381] %v616
          %v618 = vld [vmem:[%s388 + $0x1c0] sm:%s381]
          %619 = vst [vmem:[%s389 + $0x1c8] sm:%s381] %v618
          %v620 = vld [vmem:[%s388 + $0x1d4] sm:%s381]
          %621 = vst [vmem:[%s389 + $0x1cc] sm:%s381] %v620
          %v622 = vld [vmem:[%s388 + $0x1c4] sm:%s381]
          %623 = vst [vmem:[%s389 + $0x1d0] sm:%s381] %v622
          %v624 = vld [vmem:[%s388 + $0x1d8] sm:%s381]
          %625 = vst [vmem:[%s389 + $0x1d4] sm:%s381] %v624
          %v626 = vld [vmem:[%s388 + $0x1c8] sm:%s381]
          %627 = vst [vmem:[%s389 + $0x1d8] sm:%s381] %v626
          %v628 = vld [vmem:[%s388 + $0x1dc] sm:%s381]
          %629 = vst [vmem:[%s389 + $0x1dc] sm:%s381] %v628
          %v630 = vld [vmem:[%s388 + $0x1e0] sm:%s381]
          %631 = vst [vmem:[%s389 + $0x1e0] sm:%s381] %v630
          %v632 = vld [vmem:[%s388 + $0x1f4] sm:%s381]
          %633 = vst [vmem:[%s389 + $0x1e4] sm:%s381] %v632
          %v634 = vld [vmem:[%s388 + $0x1e4] sm:%s381]
          %635 = vst [vmem:[%s389 + $0x1e8] sm:%s381] %v634
          %v636 = vld [vmem:[%s388 + $0x1f8] sm:%s381]
          %637 = vst [vmem:[%s389 + $0x1ec] sm:%s381] %v636
          %v638 = vld [vmem:[%s388 + $0x1e8] sm:%s381]
          %639 = vst [vmem:[%s389 + $0x1f0] sm:%s381] %v638
          %v640 = vld [vmem:[%s388 + $0x1fc] sm:%s381]
          %641 = vst [vmem:[%s389 + $0x1f4] sm:%s381] %v640
          %v642 = vld [vmem:[%s388 + $0x1ec] sm:%s381]
          %643 = vst [vmem:[%s389 + $0x1f8] sm:%s381] %v642
          %v644 = vld [vmem:[%s388 + $0x200] sm:%s381]
          %645 = vst [vmem:[%s389 + $0x1fc] sm:%s381] %v644
          %v646 = vld [vmem:[%s388 + $0x1f0] sm:%s381]
          %647 = vst [vmem:[%s389 + $0x200] sm:%s381] %v646
          %v648 = vld [vmem:[%s388 + $0x204] sm:%s381]
          %649 = vst [vmem:[%s389 + $0x204] sm:%s381] %v648
          %v650 = vld [vmem:[%s388 + $0x208] sm:%s381]
          %651 = vst [vmem:[%s389 + $0x208] sm:%s381] %v650
          %v652 = vld [vmem:[%s388 + $0x21c] sm:%s381]
          %653 = vst [vmem:[%s389 + $0x20c] sm:%s381] %v652
          %v654 = vld [vmem:[%s388 + $0x20c] sm:%s381]
          %655 = vst [vmem:[%s389 + $0x210] sm:%s381] %v654
          %v656 = vld [vmem:[%s388 + $0x220] sm:%s381]
          %657 = vst [vmem:[%s389 + $0x214] sm:%s381] %v656
          %v658 = vld [vmem:[%s388 + $0x210] sm:%s381]
          %659 = vst [vmem:[%s389 + $0x218] sm:%s381] %v658
          %v660 = vld [vmem:[%s388 + $0x224] sm:%s381]
          %661 = vst [vmem:[%s389 + $0x21c] sm:%s381] %v660
          %v662 = vld [vmem:[%s388 + $0x214] sm:%s381]
          %663 = vst [vmem:[%s389 + $0x220] sm:%s381] %v662
          %v664 = vld [vmem:[%s388 + $0x228] sm:%s381]
          %665 = vst [vmem:[%s389 + $0x224] sm:%s381] %v664
          %v666 = vld [vmem:[%s388 + $0x218] sm:%s381]
          %667 = vst [vmem:[%s389 + $0x228] sm:%s381] %v666
          %v668 = vld [vmem:[%s388 + $0x22c] sm:%s381]
          %669 = vst [vmem:[%s389 + $0x22c] sm:%s381] %v668
          %v670 = vld [vmem:[%s388 + $0x230] sm:%s381]
          %671 = vst [vmem:[%s389 + $0x230] sm:%s381] %v670
          %v672 = vld [vmem:[%s388 + $0x244] sm:%s381]
          %673 = vst [vmem:[%s389 + $0x234] sm:%s381] %v672
          %v674 = vld [vmem:[%s388 + $0x234] sm:%s381]
          %675 = vst [vmem:[%s389 + $0x238] sm:%s381] %v674
          %v676 = vld [vmem:[%s388 + $0x248] sm:%s381]
          %677 = vst [vmem:[%s389 + $0x23c] sm:%s381] %v676
          %v678 = vld [vmem:[%s388 + $0x238] sm:%s381]
          %679 = vst [vmem:[%s389 + $0x240] sm:%s381] %v678
          %v680 = vld [vmem:[%s388 + $0x24c] sm:%s381]
          %681 = vst [vmem:[%s389 + $0x244] sm:%s381] %v680
          %v682 = vld [vmem:[%s388 + $0x23c] sm:%s381]
          %683 = vst [vmem:[%s389 + $0x248] sm:%s381] %v682
          %v684 = vld [vmem:[%s388 + $0x250] sm:%s381]
          %685 = vst [vmem:[%s389 + $0x24c] sm:%s381] %v684
          %v686 = vld [vmem:[%s388 + $0x240] sm:%s381]
          %687 = vst [vmem:[%s389 + $0x250] sm:%s381] %v686
          %v688 = vld [vmem:[%s388 + $0x254] sm:%s381]
          %689 = vst [vmem:[%s389 + $0x254] sm:%s381] %v688
          %v690 = vld [vmem:[%s388 + $0x258] sm:%s381]
          %691 = vst [vmem:[%s389 + $0x258] sm:%s381] %v690
          %v692 = vld [vmem:[%s388 + $0x26c] sm:%s381]
          %693 = vst [vmem:[%s389 + $0x25c] sm:%s381] %v692
          %v694 = vld [vmem:[%s388 + $0x25c] sm:%s381]
          %695 = vst [vmem:[%s389 + $0x260] sm:%s381] %v694
          %v696 = vld [vmem:[%s388 + $0x270] sm:%s381]
          %697 = vst [vmem:[%s389 + $0x264] sm:%s381] %v696
          %v698 = vld [vmem:[%s388 + $0x260] sm:%s381]
          %699 = vst [vmem:[%s389 + $0x268] sm:%s381] %v698
          %v700 = vld [vmem:[%s388 + $0x274] sm:%s381]
          %701 = vst [vmem:[%s389 + $0x26c] sm:%s381] %v700
          %v702 = vld [vmem:[%s388 + $0x264] sm:%s381]
          %703 = vst [vmem:[%s389 + $0x270] sm:%s381] %v702
          %v704 = vld [vmem:[%s388 + $0x278] sm:%s381]
          %705 = vst [vmem:[%s389 + $0x274] sm:%s381] %v704
          %v706 = vld [vmem:[%s388 + $0x268] sm:%s381]
          %707 = vst [vmem:[%s389 + $0x278] sm:%s381] %v706
          %v708 = vld [vmem:[%s388 + $0x27c] sm:%s381]
          %709 = vst [vmem:[%s389 + $0x27c] sm:%s381] %v708
        $region56: #{forward.1} parent=43 // loop_footer
          %s387 = sadd.s32 1, %s383
        $region57: #{forward.1} parent=43 // loop_footer_branch
          %382 = sbr.rel target = $region53
        $region58: #{forward.1} parent=43 // loop_exit
          _
      $region44: #{forward.1} parent=28 // pred_fallthru
        _
    $region29: #{forward.1} parent=1 // pred_fallthru
      _
    // Predicated region
    $region30: #{forward.1} parent=1 // pred_check
      %p31 = pneg %p27
    $region31: #{forward.1} parent=1 // pred_check_branch
      %33 = sbr.rel (%p31) target = $region33
    $region32: #{forward.1} parent=1 // pred_region
      %s34 = sshllo.u32 0, 4
      loop: start=0, step=1, limit=1
      $region34: #{forward.1} parent=32 // loop_pre_header
        _
      $region35: #{forward.1} parent=32 // loop_header
        %s36 = sphi 0, %s40
        %p37 = scmp.ge.s32.totalorder %s36, 1
        %s41 = sphi %s6, %s6
        %s42 = sphi [#allocation2], [#allocation2]
      $region36: #{forward.1} parent=32 // loop_header_branch
        %39 = sbr.rel (%p37) target = $region40
      $region37: #{forward.1} parent=32 // loop_body
        %v43 = vld [vmem:[%s41] sm:%s34]
        %44 = vst [vmem:[%s42] sm:%s34] %v43
        %v45 = vld [vmem:[%s41 + $0x14] sm:%s34]
        %46 = vst [vmem:[%s42 + $0x4] sm:%s34] %v45
        %v47 = vld [vmem:[%s41 + $0x4] sm:%s34]
        %48 = vst [vmem:[%s42 + $0x8] sm:%s34] %v47
        %v49 = vld [vmem:[%s41 + $0x18] sm:%s34]
        %50 = vst [vmem:[%s42 + $0xc] sm:%s34] %v49
        %v51 = vld [vmem:[%s41 + $0x8] sm:%s34]
        %52 = vst [vmem:[%s42 + $0x10] sm:%s34] %v51
        %v53 = vld [vmem:[%s41 + $0x1c] sm:%s34]
        %54 = vst [vmem:[%s42 + $0x14] sm:%s34] %v53
        %v55 = vld [vmem:[%s41 + $0xc] sm:%s34]
        %56 = vst [vmem:[%s42 + $0x18] sm:%s34] %v55
        %v57 = vld [vmem:[%s41 + $0x20] sm:%s34]
        %58 = vst [vmem:[%s42 + $0x1c] sm:%s34] %v57
        %v59 = vld [vmem:[%s41 + $0x10] sm:%s34]
        %60 = vst [vmem:[%s42 + $0x20] sm:%s34] %v59
        %v61 = vld [vmem:[%s41 + $0x24] sm:%s34]
        %62 = vst [vmem:[%s42 + $0x24] sm:%s34] %v61
        %v63 = vld [vmem:[%s41 + $0x28] sm:%s34]
        %64 = vst [vmem:[%s42 + $0x28] sm:%s34] %v63
        %v65 = vld [vmem:[%s41 + $0x3c] sm:%s34]
        %66 = vst [vmem:[%s42 + $0x2c] sm:%s34] %v65
        %v67 = vld [vmem:[%s41 + $0x2c] sm:%s34]
        %68 = vst [vmem:[%s42 + $0x30] sm:%s34] %v67
        %v69 = vld [vmem:[%s41 + $0x40] sm:%s34]
        %70 = vst [vmem:[%s42 + $0x34] sm:%s34] %v69
        %v71 = vld [vmem:[%s41 + $0x30] sm:%s34]
        %72 = vst [vmem:[%s42 + $0x38] sm:%s34] %v71
        %v73 = vld [vmem:[%s41 + $0x44] sm:%s34]
        %74 = vst [vmem:[%s42 + $0x3c] sm:%s34] %v73
        %v75 = vld [vmem:[%s41 + $0x34] sm:%s34]
        %76 = vst [vmem:[%s42 + $0x40] sm:%s34] %v75
        %v77 = vld [vmem:[%s41 + $0x48] sm:%s34]
        %78 = vst [vmem:[%s42 + $0x44] sm:%s34] %v77
        %v79 = vld [vmem:[%s41 + $0x38] sm:%s34]
        %80 = vst [vmem:[%s42 + $0x48] sm:%s34] %v79
        %v81 = vld [vmem:[%s41 + $0x4c] sm:%s34]
        %82 = vst [vmem:[%s42 + $0x4c] sm:%s34] %v81
        %v83 = vld [vmem:[%s41 + $0x50] sm:%s34]
        %84 = vst [vmem:[%s42 + $0x50] sm:%s34] %v83
        %v85 = vld [vmem:[%s41 + $0x64] sm:%s34]
        %86 = vst [vmem:[%s42 + $0x54] sm:%s34] %v85
        %v87 = vld [vmem:[%s41 + $0x54] sm:%s34]
        %88 = vst [vmem:[%s42 + $0x58] sm:%s34] %v87
        %v89 = vld [vmem:[%s41 + $0x68] sm:%s34]
        %90 = vst [vmem:[%s42 + $0x5c] sm:%s34] %v89
        %v91 = vld [vmem:[%s41 + $0x58] sm:%s34]
        %92 = vst [vmem:[%s42 + $0x60] sm:%s34] %v91
        %v93 = vld [vmem:[%s41 + $0x6c] sm:%s34]
        %94 = vst [vmem:[%s42 + $0x64] sm:%s34] %v93
        %v95 = vld [vmem:[%s41 + $0x5c] sm:%s34]
        %96 = vst [vmem:[%s42 + $0x68] sm:%s34] %v95
        %v97 = vld [vmem:[%s41 + $0x70] sm:%s34]
        %98 = vst [vmem:[%s42 + $0x6c] sm:%s34] %v97
        %v99 = vld [vmem:[%s41 + $0x60] sm:%s34]
        %100 = vst [vmem:[%s42 + $0x70] sm:%s34] %v99
        %v101 = vld [vmem:[%s41 + $0x74] sm:%s34]
        %102 = vst [vmem:[%s42 + $0x74] sm:%s34] %v101
        %v103 = vld [vmem:[%s41 + $0x78] sm:%s34]
        %104 = vst [vmem:[%s42 + $0x78] sm:%s34] %v103
        %v105 = vld [vmem:[%s41 + $0x8c] sm:%s34]
        %106 = vst [vmem:[%s42 + $0x7c] sm:%s34] %v105
        %v107 = vld [vmem:[%s41 + $0x7c] sm:%s34]
        %108 = vst [vmem:[%s42 + $0x80] sm:%s34] %v107
        %v109 = vld [vmem:[%s41 + $0x90] sm:%s34]
        %110 = vst [vmem:[%s42 + $0x84] sm:%s34] %v109
        %v111 = vld [vmem:[%s41 + $0x80] sm:%s34]
        %112 = vst [vmem:[%s42 + $0x88] sm:%s34] %v111
        %v113 = vld [vmem:[%s41 + $0x94] sm:%s34]
        %114 = vst [vmem:[%s42 + $0x8c] sm:%s34] %v113
        %v115 = vld [vmem:[%s41 + $0x84] sm:%s34]
        %116 = vst [vmem:[%s42 + $0x90] sm:%s34] %v115
        %v117 = vld [vmem:[%s41 + $0x98] sm:%s34]
        %118 = vst [vmem:[%s42 + $0x94] sm:%s34] %v117
        %v119 = vld [vmem:[%s41 + $0x88] sm:%s34]
        %120 = vst [vmem:[%s42 + $0x98] sm:%s34] %v119
        %v121 = vld [vmem:[%s41 + $0x9c] sm:%s34]
        %122 = vst [vmem:[%s42 + $0x9c] sm:%s34] %v121
        %v123 = vld [vmem:[%s41 + $0xa0] sm:%s34]
        %124 = vst [vmem:[%s42 + $0xa0] sm:%s34] %v123
        %v125 = vld [vmem:[%s41 + $0xb4] sm:%s34]
        %126 = vst [vmem:[%s42 + $0xa4] sm:%s34] %v125
        %v127 = vld [vmem:[%s41 + $0xa4] sm:%s34]
        %128 = vst [vmem:[%s42 + $0xa8] sm:%s34] %v127
        %v129 = vld [vmem:[%s41 + $0xb8] sm:%s34]
        %130 = vst [vmem:[%s42 + $0xac] sm:%s34] %v129
        %v131 = vld [vmem:[%s41 + $0xa8] sm:%s34]
        %132 = vst [vmem:[%s42 + $0xb0] sm:%s34] %v131
        %v133 = vld [vmem:[%s41 + $0xbc] sm:%s34]
        %134 = vst [vmem:[%s42 + $0xb4] sm:%s34] %v133
        %v135 = vld [vmem:[%s41 + $0xac] sm:%s34]
        %136 = vst [vmem:[%s42 + $0xb8] sm:%s34] %v135
        %v137 = vld [vmem:[%s41 + $0xc0] sm:%s34]
        %138 = vst [vmem:[%s42 + $0xbc] sm:%s34] %v137
        %v139 = vld [vmem:[%s41 + $0xb0] sm:%s34]
        %140 = vst [vmem:[%s42 + $0xc0] sm:%s34] %v139
        %v141 = vld [vmem:[%s41 + $0xc4] sm:%s34]
        %142 = vst [vmem:[%s42 + $0xc4] sm:%s34] %v141
        %v143 = vld [vmem:[%s41 + $0xc8] sm:%s34]
        %144 = vst [vmem:[%s42 + $0xc8] sm:%s34] %v143
        %v145 = vld [vmem:[%s41 + $0xdc] sm:%s34]
        %146 = vst [vmem:[%s42 + $0xcc] sm:%s34] %v145
        %v147 = vld [vmem:[%s41 + $0xcc] sm:%s34]
        %148 = vst [vmem:[%s42 + $0xd0] sm:%s34] %v147
        %v149 = vld [vmem:[%s41 + $0xe0] sm:%s34]
        %150 = vst [vmem:[%s42 + $0xd4] sm:%s34] %v149
        %v151 = vld [vmem:[%s41 + $0xd0] sm:%s34]
        %152 = vst [vmem:[%s42 + $0xd8] sm:%s34] %v151
        %v153 = vld [vmem:[%s41 + $0xe4] sm:%s34]
        %154 = vst [vmem:[%s42 + $0xdc] sm:%s34] %v153
        %v155 = vld [vmem:[%s41 + $0xd4] sm:%s34]
        %156 = vst [vmem:[%s42 + $0xe0] sm:%s34] %v155
        %v157 = vld [vmem:[%s41 + $0xe8] sm:%s34]
        %158 = vst [vmem:[%s42 + $0xe4] sm:%s34] %v157
        %v159 = vld [vmem:[%s41 + $0xd8] sm:%s34]
        %160 = vst [vmem:[%s42 + $0xe8] sm:%s34] %v159
        %v161 = vld [vmem:[%s41 + $0xec] sm:%s34]
        %162 = vst [vmem:[%s42 + $0xec] sm:%s34] %v161
        %v163 = vld [vmem:[%s41 + $0xf0] sm:%s34]
        %164 = vst [vmem:[%s42 + $0xf0] sm:%s34] %v163
        %v165 = vld [vmem:[%s41 + $0x104] sm:%s34]
        %166 = vst [vmem:[%s42 + $0xf4] sm:%s34] %v165
        %v167 = vld [vmem:[%s41 + $0xf4] sm:%s34]
        %168 = vst [vmem:[%s42 + $0xf8] sm:%s34] %v167
        %v169 = vld [vmem:[%s41 + $0x108] sm:%s34]
        %170 = vst [vmem:[%s42 + $0xfc] sm:%s34] %v169
        %v171 = vld [vmem:[%s41 + $0xf8] sm:%s34]
        %172 = vst [vmem:[%s42 + $0x100] sm:%s34] %v171
        %v173 = vld [vmem:[%s41 + $0x10c] sm:%s34]
        %174 = vst [vmem:[%s42 + $0x104] sm:%s34] %v173
        %v175 = vld [vmem:[%s41 + $0xfc] sm:%s34]
        %176 = vst [vmem:[%s42 + $0x108] sm:%s34] %v175
        %v177 = vld [vmem:[%s41 + $0x110] sm:%s34]
        %178 = vst [vmem:[%s42 + $0x10c] sm:%s34] %v177
        %v179 = vld [vmem:[%s41 + $0x100] sm:%s34]
        %180 = vst [vmem:[%s42 + $0x110] sm:%s34] %v179
        %v181 = vld [vmem:[%s41 + $0x114] sm:%s34]
        %182 = vst [vmem:[%s42 + $0x114] sm:%s34] %v181
        %v183 = vld [vmem:[%s41 + $0x118] sm:%s34]
        %184 = vst [vmem:[%s42 + $0x118] sm:%s34] %v183
        %v185 = vld [vmem:[%s41 + $0x12c] sm:%s34]
        %186 = vst [vmem:[%s42 + $0x11c] sm:%s34] %v185
        %v187 = vld [vmem:[%s41 + $0x11c] sm:%s34]
        %188 = vst [vmem:[%s42 + $0x120] sm:%s34] %v187
        %v189 = vld [vmem:[%s41 + $0x130] sm:%s34]
        %190 = vst [vmem:[%s42 + $0x124] sm:%s34] %v189
        %v191 = vld [vmem:[%s41 + $0x120] sm:%s34]
        %192 = vst [vmem:[%s42 + $0x128] sm:%s34] %v191
        %v193 = vld [vmem:[%s41 + $0x134] sm:%s34]
        %194 = vst [vmem:[%s42 + $0x12c] sm:%s34] %v193
        %v195 = vld [vmem:[%s41 + $0x124] sm:%s34]
        %196 = vst [vmem:[%s42 + $0x130] sm:%s34] %v195
        %v197 = vld [vmem:[%s41 + $0x138] sm:%s34]
        %198 = vst [vmem:[%s42 + $0x134] sm:%s34] %v197
        %v199 = vld [vmem:[%s41 + $0x128] sm:%s34]
        %200 = vst [vmem:[%s42 + $0x138] sm:%s34] %v199
        %v201 = vld [vmem:[%s41 + $0x13c] sm:%s34]
        %202 = vst [vmem:[%s42 + $0x13c] sm:%s34] %v201
        %v203 = vld [vmem:[%s41 + $0x140] sm:%s34]
        %204 = vst [vmem:[%s42 + $0x140] sm:%s34] %v203
        %v205 = vld [vmem:[%s41 + $0x154] sm:%s34]
        %206 = vst [vmem:[%s42 + $0x144] sm:%s34] %v205
        %v207 = vld [vmem:[%s41 + $0x144] sm:%s34]
        %208 = vst [vmem:[%s42 + $0x148] sm:%s34] %v207
        %v209 = vld [vmem:[%s41 + $0x158] sm:%s34]
        %210 = vst [vmem:[%s42 + $0x14c] sm:%s34] %v209
        %v211 = vld [vmem:[%s41 + $0x148] sm:%s34]
        %212 = vst [vmem:[%s42 + $0x150] sm:%s34] %v211
        %v213 = vld [vmem:[%s41 + $0x15c] sm:%s34]
        %214 = vst [vmem:[%s42 + $0x154] sm:%s34] %v213
        %v215 = vld [vmem:[%s41 + $0x14c] sm:%s34]
        %216 = vst [vmem:[%s42 + $0x158] sm:%s34] %v215
        %v217 = vld [vmem:[%s41 + $0x160] sm:%s34]
        %218 = vst [vmem:[%s42 + $0x15c] sm:%s34] %v217
        %v219 = vld [vmem:[%s41 + $0x150] sm:%s34]
        %220 = vst [vmem:[%s42 + $0x160] sm:%s34] %v219
        %v221 = vld [vmem:[%s41 + $0x164] sm:%s34]
        %222 = vst [vmem:[%s42 + $0x164] sm:%s34] %v221
        %v223 = vld [vmem:[%s41 + $0x168] sm:%s34]
        %224 = vst [vmem:[%s42 + $0x168] sm:%s34] %v223
        %v225 = vld [vmem:[%s41 + $0x17c] sm:%s34]
        %226 = vst [vmem:[%s42 + $0x16c] sm:%s34] %v225
        %v227 = vld [vmem:[%s41 + $0x16c] sm:%s34]
        %228 = vst [vmem:[%s42 + $0x170] sm:%s34] %v227
        %v229 = vld [vmem:[%s41 + $0x180] sm:%s34]
        %230 = vst [vmem:[%s42 + $0x174] sm:%s34] %v229
        %v231 = vld [vmem:[%s41 + $0x170] sm:%s34]
        %232 = vst [vmem:[%s42 + $0x178] sm:%s34] %v231
        %v233 = vld [vmem:[%s41 + $0x184] sm:%s34]
        %234 = vst [vmem:[%s42 + $0x17c] sm:%s34] %v233
        %v235 = vld [vmem:[%s41 + $0x174] sm:%s34]
        %236 = vst [vmem:[%s42 + $0x180] sm:%s34] %v235
        %v237 = vld [vmem:[%s41 + $0x188] sm:%s34]
        %238 = vst [vmem:[%s42 + $0x184] sm:%s34] %v237
        %v239 = vld [vmem:[%s41 + $0x178] sm:%s34]
        %240 = vst [vmem:[%s42 + $0x188] sm:%s34] %v239
        %v241 = vld [vmem:[%s41 + $0x18c] sm:%s34]
        %242 = vst [vmem:[%s42 + $0x18c] sm:%s34] %v241
        %v243 = vld [vmem:[%s41 + $0x190] sm:%s34]
        %244 = vst [vmem:[%s42 + $0x190] sm:%s34] %v243
        %v245 = vld [vmem:[%s41 + $0x1a4] sm:%s34]
        %246 = vst [vmem:[%s42 + $0x194] sm:%s34] %v245
        %v247 = vld [vmem:[%s41 + $0x194] sm:%s34]
        %248 = vst [vmem:[%s42 + $0x198] sm:%s34] %v247
        %v249 = vld [vmem:[%s41 + $0x1a8] sm:%s34]
        %250 = vst [vmem:[%s42 + $0x19c] sm:%s34] %v249
        %v251 = vld [vmem:[%s41 + $0x198] sm:%s34]
        %252 = vst [vmem:[%s42 + $0x1a0] sm:%s34] %v251
        %v253 = vld [vmem:[%s41 + $0x1ac] sm:%s34]
        %254 = vst [vmem:[%s42 + $0x1a4] sm:%s34] %v253
        %v255 = vld [vmem:[%s41 + $0x19c] sm:%s34]
        %256 = vst [vmem:[%s42 + $0x1a8] sm:%s34] %v255
        %v257 = vld [vmem:[%s41 + $0x1b0] sm:%s34]
        %258 = vst [vmem:[%s42 + $0x1ac] sm:%s34] %v257
        %v259 = vld [vmem:[%s41 + $0x1a0] sm:%s34]
        %260 = vst [vmem:[%s42 + $0x1b0] sm:%s34] %v259
        %v261 = vld [vmem:[%s41 + $0x1b4] sm:%s34]
        %262 = vst [vmem:[%s42 + $0x1b4] sm:%s34] %v261
        %v263 = vld [vmem:[%s41 + $0x1b8] sm:%s34]
        %264 = vst [vmem:[%s42 + $0x1b8] sm:%s34] %v263
        %v265 = vld [vmem:[%s41 + $0x1cc] sm:%s34]
        %266 = vst [vmem:[%s42 + $0x1bc] sm:%s34] %v265
        %v267 = vld [vmem:[%s41 + $0x1bc] sm:%s34]
        %268 = vst [vmem:[%s42 + $0x1c0] sm:%s34] %v267
        %v269 = vld [vmem:[%s41 + $0x1d0] sm:%s34]
        %270 = vst [vmem:[%s42 + $0x1c4] sm:%s34] %v269
        %v271 = vld [vmem:[%s41 + $0x1c0] sm:%s34]
        %272 = vst [vmem:[%s42 + $0x1c8] sm:%s34] %v271
        %v273 = vld [vmem:[%s41 + $0x1d4] sm:%s34]
        %274 = vst [vmem:[%s42 + $0x1cc] sm:%s34] %v273
        %v275 = vld [vmem:[%s41 + $0x1c4] sm:%s34]
        %276 = vst [vmem:[%s42 + $0x1d0] sm:%s34] %v275
        %v277 = vld [vmem:[%s41 + $0x1d8] sm:%s34]
        %278 = vst [vmem:[%s42 + $0x1d4] sm:%s34] %v277
        %v279 = vld [vmem:[%s41 + $0x1c8] sm:%s34]
        %280 = vst [vmem:[%s42 + $0x1d8] sm:%s34] %v279
        %v281 = vld [vmem:[%s41 + $0x1dc] sm:%s34]
        %282 = vst [vmem:[%s42 + $0x1dc] sm:%s34] %v281
        %v283 = vld [vmem:[%s41 + $0x1e0] sm:%s34]
        %284 = vst [vmem:[%s42 + $0x1e0] sm:%s34] %v283
        %v285 = vld [vmem:[%s41 + $0x1f4] sm:%s34]
        %286 = vst [vmem:[%s42 + $0x1e4] sm:%s34] %v285
        %v287 = vld [vmem:[%s41 + $0x1e4] sm:%s34]
        %288 = vst [vmem:[%s42 + $0x1e8] sm:%s34] %v287
        %v289 = vld [vmem:[%s41 + $0x1f8] sm:%s34]
        %290 = vst [vmem:[%s42 + $0x1ec] sm:%s34] %v289
        %v291 = vld [vmem:[%s41 + $0x1e8] sm:%s34]
        %292 = vst [vmem:[%s42 + $0x1f0] sm:%s34] %v291
        %v293 = vld [vmem:[%s41 + $0x1fc] sm:%s34]
        %294 = vst [vmem:[%s42 + $0x1f4] sm:%s34] %v293
        %v295 = vld [vmem:[%s41 + $0x1ec] sm:%s34]
        %296 = vst [vmem:[%s42 + $0x1f8] sm:%s34] %v295
        %v297 = vld [vmem:[%s41 + $0x200] sm:%s34]
        %298 = vst [vmem:[%s42 + $0x1fc] sm:%s34] %v297
        %v299 = vld [vmem:[%s41 + $0x1f0] sm:%s34]
        %300 = vst [vmem:[%s42 + $0x200] sm:%s34] %v299
        %v301 = vld [vmem:[%s41 + $0x204] sm:%s34]
        %302 = vst [vmem:[%s42 + $0x204] sm:%s34] %v301
        %v303 = vld [vmem:[%s41 + $0x208] sm:%s34]
        %304 = vst [vmem:[%s42 + $0x208] sm:%s34] %v303
        %v305 = vld [vmem:[%s41 + $0x21c] sm:%s34]
        %306 = vst [vmem:[%s42 + $0x20c] sm:%s34] %v305
        %v307 = vld [vmem:[%s41 + $0x20c] sm:%s34]
        %308 = vst [vmem:[%s42 + $0x210] sm:%s34] %v307
        %v309 = vld [vmem:[%s41 + $0x220] sm:%s34]
        %310 = vst [vmem:[%s42 + $0x214] sm:%s34] %v309
        %v311 = vld [vmem:[%s41 + $0x210] sm:%s34]
        %312 = vst [vmem:[%s42 + $0x218] sm:%s34] %v311
        %v313 = vld [vmem:[%s41 + $0x224] sm:%s34]
        %314 = vst [vmem:[%s42 + $0x21c] sm:%s34] %v313
        %v315 = vld [vmem:[%s41 + $0x214] sm:%s34]
        %316 = vst [vmem:[%s42 + $0x220] sm:%s34] %v315
        %v317 = vld [vmem:[%s41 + $0x228] sm:%s34]
        %318 = vst [vmem:[%s42 + $0x224] sm:%s34] %v317
        %v319 = vld [vmem:[%s41 + $0x218] sm:%s34]
        %320 = vst [vmem:[%s42 + $0x228] sm:%s34] %v319
        %v321 = vld [vmem:[%s41 + $0x22c] sm:%s34]
        %322 = vst [vmem:[%s42 + $0x22c] sm:%s34] %v321
        %v323 = vld [vmem:[%s41 + $0x230] sm:%s34]
        %324 = vst [vmem:[%s42 + $0x230] sm:%s34] %v323
        %v325 = vld [vmem:[%s41 + $0x244] sm:%s34]
        %326 = vst [vmem:[%s42 + $0x234] sm:%s34] %v325
        %v327 = vld [vmem:[%s41 + $0x234] sm:%s34]
        %328 = vst [vmem:[%s42 + $0x238] sm:%s34] %v327
        %v329 = vld [vmem:[%s41 + $0x248] sm:%s34]
        %330 = vst [vmem:[%s42 + $0x23c] sm:%s34] %v329
        %v331 = vld [vmem:[%s41 + $0x238] sm:%s34]
        %332 = vst [vmem:[%s42 + $0x240] sm:%s34] %v331
        %v333 = vld [vmem:[%s41 + $0x24c] sm:%s34]
        %334 = vst [vmem:[%s42 + $0x244] sm:%s34] %v333
        %v335 = vld [vmem:[%s41 + $0x23c] sm:%s34]
        %336 = vst [vmem:[%s42 + $0x248] sm:%s34] %v335
        %v337 = vld [vmem:[%s41 + $0x250] sm:%s34]
        %338 = vst [vmem:[%s42 + $0x24c] sm:%s34] %v337
        %v339 = vld [vmem:[%s41 + $0x240] sm:%s34]
        %340 = vst [vmem:[%s42 + $0x250] sm:%s34] %v339
        %v341 = vld [vmem:[%s41 + $0x254] sm:%s34]
        %342 = vst [vmem:[%s42 + $0x254] sm:%s34] %v341
        %v343 = vld [vmem:[%s41 + $0x258] sm:%s34]
        %344 = vst [vmem:[%s42 + $0x258] sm:%s34] %v343
        %v345 = vld [vmem:[%s41 + $0x26c] sm:%s34]
        %346 = vst [vmem:[%s42 + $0x25c] sm:%s34] %v345
        %v347 = vld [vmem:[%s41 + $0x25c] sm:%s34]
        %348 = vst [vmem:[%s42 + $0x260] sm:%s34] %v347
        %v349 = vld [vmem:[%s41 + $0x270] sm:%s34]
        %350 = vst [vmem:[%s42 + $0x264] sm:%s34] %v349
        %v351 = vld [vmem:[%s41 + $0x260] sm:%s34]
        %352 = vst [vmem:[%s42 + $0x268] sm:%s34] %v351
        %v353 = vld [vmem:[%s41 + $0x274] sm:%s34]
        %354 = vst [vmem:[%s42 + $0x26c] sm:%s34] %v353
        %v355 = vld [vmem:[%s41 + $0x264] sm:%s34]
        %356 = vst [vmem:[%s42 + $0x270] sm:%s34] %v355
        %v357 = vld [vmem:[%s41 + $0x278] sm:%s34]
        %358 = vst [vmem:[%s42 + $0x274] sm:%s34] %v357
        %v359 = vld [vmem:[%s41 + $0x268] sm:%s34]
        %360 = vst [vmem:[%s42 + $0x278] sm:%s34] %v359
        %v361 = vld [vmem:[%s41 + $0x27c] sm:%s34]
        %362 = vst [vmem:[%s42 + $0x27c] sm:%s34] %v361
      $region38: #{forward.1} parent=32 // loop_footer
        %s40 = sadd.s32 1, %s36
      $region39: #{forward.1} parent=32 // loop_footer_branch
        %35 = sbr.rel target = $region35
      $region40: #{forward.1} parent=32 // loop_exit
        _
    $region33: #{forward.1} parent=1 // pred_fallthru
      _
    // Predicated region
    $region59: #{forward.1} parent=1 // pred_check
      _
    $region60: #{forward.1} parent=1 // pred_check_branch
      %712 = sbr.rel (0) target = $region62
    $region61: #{forward.1} parent=1 // pred_region
      %713 = vsyncadd [#allocation3], 10240
    $region62: #{forward.1} parent=1 // pred_fallthru
      _
    %v714 = vld [vmem:[%s0] sm:$0xff]
    %v715 = vld [vmem:[%s0 + $0x8] sm:$0xff]
    %v716 = vld [vmem:[%s0 + $0x10] sm:$0xff]
    %v717 = vld [vmem:[%s0 + $0x18] sm:$0xff]
    %v718 = vld [vmem:[%s0 + $0x20] sm:$0xff]
    %v719 = vld [vmem:[%s0 + $0x28] sm:$0xff]
    %v720 = vld [vmem:[%s0 + $0x30] sm:$0xff]
    %v721 = vpack.c.bf16 %v714, %v714
    %v722 = vpack.c.bf16 %v715, %v715
    %v723 = vpack.c.bf16 %v716, %v716
    %v724 = vpack.c.bf16 %v717, %v717
    %v725 = vpack.c.bf16 %v718, %v718
    %v726 = vpack.c.bf16 %v719, %v719
    %v727 = vpack.c.bf16 %v720, %v720
    %v728 = vld [vmem:[%s1] sm:$0xff]
    %v729 = vld [vmem:[%s1 + $0x8] sm:$0xff]
    %v730 = vld [vmem:[%s1 + $0x10] sm:$0xff]
    %v731 = vld [vmem:[%s1 + $0x18] sm:$0xff]
    %v732 = vld [vmem:[%s1 + $0x20] sm:$0xff]
    %v733 = vld [vmem:[%s1 + $0x28] sm:$0xff]
    %v734 = vld [vmem:[%s1 + $0x30] sm:$0xff]
    %v735 = vld [vmem:[%s1 + $0x38] sm:$0xff]
    %v736 = vld [vmem:[%s1 + $0x40] sm:$0xff]
    %v737 = vld [vmem:[%s1 + $0x48] sm:$0xff]
    %v738 = vld [vmem:[%s1 + $0x50] sm:$0xff]
    %v739 = vld [vmem:[%s1 + $0x58] sm:$0xff]
    %v740 = vld [vmem:[%s1 + $0x60] sm:$0xff]
    %v741 = vld [vmem:[%s1 + $0x68] sm:$0xff]
    %v742 = vld [vmem:[%s1 + $0x70] sm:$0xff]
    %v743 = vld [vmem:[%s1 + $0x78] sm:$0xff]
    %v744 = vld [vmem:[%s1 + $0x80] sm:$0xff]
    %v745 = vld [vmem:[%s1 + $0x88] sm:$0xff]
    %v746 = vld [vmem:[%s1 + $0x90] sm:$0xff]
    %v747 = vld [vmem:[%s1 + $0x98] sm:$0xff]
    %v748 = vld [vmem:[%s1 + $0xa0] sm:$0xff]
    %v749 = vld [vmem:[%s1 + $0xa8] sm:$0xff]
    %v750 = vld [vmem:[%s1 + $0xb0] sm:$0xff]
    %v751 = vld [vmem:[%s1 + $0xb8] sm:$0xff]
    %v752 = vld [vmem:[%s1 + $0xc0] sm:$0xff]
    %v753 = vld [vmem:[%s1 + $0xc8] sm:$0xff]
    %v754 = vld [vmem:[%s1 + $0xd0] sm:$0xff]
    %v755 = vld [vmem:[%s1 + $0xd8] sm:$0xff]
    %v756 = vld [vmem:[%s1 + $0xe0] sm:$0xff]
    %v757 = vld [vmem:[%s1 + $0xe8] sm:$0xff]
    %v758 = vld [vmem:[%s1 + $0xf0] sm:$0xff]
    %v759 = vld [vmem:[%s1 + $0xf8] sm:$0xff]
    %v760 = vld [vmem:[%s1 + $0x100] sm:$0xff]
    %v761 = vld [vmem:[%s1 + $0x108] sm:$0xff]
    %v762 = vld [vmem:[%s1 + $0x110] sm:$0xff]
    %v763 = vld [vmem:[%s1 + $0x118] sm:$0xff]
    %v764 = vld [vmem:[%s1 + $0x120] sm:$0xff]
    %v765 = vld [vmem:[%s1 + $0x128] sm:$0xff]
    %v766 = vld [vmem:[%s1 + $0x130] sm:$0xff]
    %v767 = vld [vmem:[%s1 + $0x138] sm:$0xff]
    %v768 = vld [vmem:[%s1 + $0x140] sm:$0xff]
    %v769 = vld [vmem:[%s1 + $0x148] sm:$0xff]
    %v770 = vld [vmem:[%s1 + $0x150] sm:$0xff]
    %v771 = vld [vmem:[%s1 + $0x158] sm:$0xff]
    %v772 = vld [vmem:[%s1 + $0x160] sm:$0xff]
    %v773 = vld [vmem:[%s1 + $0x168] sm:$0xff]
    %v774 = vld [vmem:[%s1 + $0x170] sm:$0xff]
    %v775 = vld [vmem:[%s1 + $0x178] sm:$0xff]
    %v776 = vld [vmem:[%s1 + $0x180] sm:$0xff]
    %v777 = vld [vmem:[%s1 + $0x188] sm:$0xff]
    %v778 = vld [vmem:[%s1 + $0x190] sm:$0xff]
    %v779 = vld [vmem:[%s1 + $0x198] sm:$0xff]
    %v780 = vld [vmem:[%s1 + $0x1a0] sm:$0xff]
    %v781 = vld [vmem:[%s1 + $0x1a8] sm:$0xff]
    %v782 = vld [vmem:[%s1 + $0x1b0] sm:$0xff]
    %v783 = vld [vmem:[%s1 + $0x1b8] sm:$0xff]
    %v784 = vld [vmem:[%s1 + $0x1c0] sm:$0xff]
    %v785 = vld [vmem:[%s1 + $0x1c8] sm:$0xff]
    %v786 = vld [vmem:[%s1 + $0x1d0] sm:$0xff]
    %v787 = vld [vmem:[%s1 + $0x1d8] sm:$0xff]
    %v788 = vld [vmem:[%s1 + $0x1e0] sm:$0xff]
    %v789 = vld [vmem:[%s1 + $0x1e8] sm:$0xff]
    %v790 = vld [vmem:[%s1 + $0x1f0] sm:$0xff]
    %v791 = vld [vmem:[%s1 + $0x1f8] sm:$0xff]
    %v792 = vld [vmem:[%s1 + $0x200] sm:$0xff]
    %v793 = vld [vmem:[%s1 + $0x208] sm:$0xff]
    %v794 = vld [vmem:[%s1 + $0x210] sm:$0xff]
    %v795 = vld [vmem:[%s1 + $0x218] sm:$0xff]
    %v796 = vld [vmem:[%s1 + $0x220] sm:$0xff]
    %v797 = vld [vmem:[%s1 + $0x228] sm:$0xff]
    %v798 = vld [vmem:[%s1 + $0x230] sm:$0xff]
    %v799 = vld [vmem:[%s1 + $0x238] sm:$0xff]
    %v800 = vld [vmem:[%s1 + $0x240] sm:$0xff]
    %v801 = vld [vmem:[%s1 + $0x248] sm:$0xff]
    %v802 = vld [vmem:[%s1 + $0x250] sm:$0xff]
    %v803 = vld [vmem:[%s1 + $0x258] sm:$0xff]
    %v804 = vld [vmem:[%s1 + $0x260] sm:$0xff]
    %v805 = vld [vmem:[%s1 + $0x268] sm:$0xff]
    %v806 = vld [vmem:[%s1 + $0x270] sm:$0xff]
    %v807 = vld [vmem:[%s1 + $0x278] sm:$0xff]
    %v808 = vld [vmem:[%s1 + $0x280] sm:$0xff]
    %v809 = vld [vmem:[%s1 + $0x288] sm:$0xff]
    %v810 = vld [vmem:[%s1 + $0x290] sm:$0xff]
    %v811 = vld [vmem:[%s1 + $0x298] sm:$0xff]
    %v812 = vld [vmem:[%s1 + $0x2a0] sm:$0xff]
    %v813 = vld [vmem:[%s1 + $0x2a8] sm:$0xff]
    %v814 = vld [vmem:[%s1 + $0x2b0] sm:$0xff]
    %v815 = vld [vmem:[%s1 + $0x2b8] sm:$0xff]
    %v816 = vld [vmem:[%s1 + $0x2c0] sm:$0xff]
    %v817 = vld [vmem:[%s1 + $0x2c8] sm:$0xff]
    %v818 = vld [vmem:[%s1 + $0x2d0] sm:$0xff]
    %v819 = vld [vmem:[%s1 + $0x2d8] sm:$0xff]
    %v820 = vld [vmem:[%s1 + $0x2e0] sm:$0xff]
    %v821 = vld [vmem:[%s1 + $0x2e8] sm:$0xff]
    %v822 = vld [vmem:[%s1 + $0x2f0] sm:$0xff]
    %v823 = vld [vmem:[%s1 + $0x2f8] sm:$0xff]
    %v824 = vld [vmem:[%s1 + $0x300] sm:$0xff]
    %v825 = vld [vmem:[%s1 + $0x308] sm:$0xff]
    %v826 = vld [vmem:[%s2] sm:$0x3]
    %v828 = vlaneseq
    %v829 = vshrl.u32 %v828, 7
    %v830 = vsub.s32 0, %v829
    %v831 = vrot.slane %v826, %v830
    %v832 = vlaneseq
    %v833 = vshrl.u32 %v832, 7
    %v834 = vsub.s32 1, %v833
    %v835 = vrot.slane %v826, %v834
    %v936 = vunpack.c.l.b16 %v728
    %v937 = vunpack.c.h.b16 %v728
    %v938 = vunpack.c.l.b16 %v729
    %v939 = vunpack.c.h.b16 %v729
    %v940 = vunpack.c.l.b16 %v730
    %v941 = vunpack.c.h.b16 %v730
    %v942 = vunpack.c.l.b16 %v731
    %v943 = vunpack.c.h.b16 %v731
    %v944 = vunpack.c.l.b16 %v732
    %v945 = vunpack.c.h.b16 %v732
    %v946 = vunpack.c.l.b16 %v733
    %v947 = vunpack.c.h.b16 %v733
    %v948 = vunpack.c.l.b16 %v734
    %v949 = vunpack.c.h.b16 %v734
    %v950 = vunpack.c.l.b16 %v735
    %v951 = vunpack.c.h.b16 %v735
    %v952 = vunpack.c.l.b16 %v736
    %v953 = vunpack.c.h.b16 %v736
    %v954 = vunpack.c.l.b16 %v737
    %v955 = vunpack.c.h.b16 %v737
    %v956 = vunpack.c.l.b16 %v738
    %v957 = vunpack.c.h.b16 %v738
    %v958 = vunpack.c.l.b16 %v739
    %v959 = vunpack.c.h.b16 %v739
    %v960 = vunpack.c.l.b16 %v740
    %v961 = vunpack.c.h.b16 %v740
    %v962 = vunpack.c.l.b16 %v741
    %v963 = vunpack.c.h.b16 %v741
    %v964 = vunpack.c.l.b16 %v742
    %v965 = vunpack.c.h.b16 %v742
    %v966 = vunpack.c.l.b16 %v743
    %v967 = vunpack.c.h.b16 %v743
    %v968 = vunpack.c.l.b16 %v744
    %v969 = vunpack.c.h.b16 %v744
    %v970 = vunpack.c.l.b16 %v745
    %v971 = vunpack.c.h.b16 %v745
    %v972 = vunpack.c.l.b16 %v746
    %v973 = vunpack.c.h.b16 %v746
    %v974 = vunpack.c.l.b16 %v747
    %v975 = vunpack.c.h.b16 %v747
    %v976 = vunpack.c.l.b16 %v748
    %v977 = vunpack.c.h.b16 %v748
    %v978 = vunpack.c.l.b16 %v749
    %v979 = vunpack.c.h.b16 %v749
    %v980 = vunpack.c.l.b16 %v750
    %v981 = vunpack.c.h.b16 %v750
    %v982 = vunpack.c.l.b16 %v751
    %v983 = vunpack.c.h.b16 %v751
    %v984 = vunpack.c.l.b16 %v752
    %v985 = vunpack.c.h.b16 %v752
    %v986 = vunpack.c.l.b16 %v753
    %v987 = vunpack.c.h.b16 %v753
    %v988 = vunpack.c.l.b16 %v754
    %v989 = vunpack.c.h.b16 %v754
    %v990 = vunpack.c.l.b16 %v755
    %v991 = vunpack.c.h.b16 %v755
    %v992 = vunpack.c.l.b16 %v756
    %v993 = vunpack.c.h.b16 %v756
    %v994 = vunpack.c.l.b16 %v757
    %v995 = vunpack.c.h.b16 %v757
    %v996 = vunpack.c.l.b16 %v758
    %v997 = vunpack.c.h.b16 %v758
    %v998 = vunpack.c.l.b16 %v759
    %v999 = vunpack.c.h.b16 %v759
    %v1000 = vunpack.c.l.b16 %v760
    %v1001 = vunpack.c.h.b16 %v760
    %v1002 = vunpack.c.l.b16 %v761
    %v1003 = vunpack.c.h.b16 %v761
    %v1004 = vunpack.c.l.b16 %v762
    %v1005 = vunpack.c.h.b16 %v762
    %v1006 = vunpack.c.l.b16 %v763
    %v1007 = vunpack.c.h.b16 %v763
    %v1008 = vunpack.c.l.b16 %v764
    %v1009 = vunpack.c.h.b16 %v764
    %v1010 = vunpack.c.l.b16 %v765
    %v1011 = vunpack.c.h.b16 %v765
    %v1012 = vunpack.c.l.b16 %v766
    %v1013 = vunpack.c.h.b16 %v766
    %v1014 = vunpack.c.l.b16 %v767
    %v1015 = vunpack.c.h.b16 %v767
    %v1016 = vunpack.c.l.b16 %v768
    %v1017 = vunpack.c.h.b16 %v768
    %v1018 = vunpack.c.l.b16 %v769
    %v1019 = vunpack.c.h.b16 %v769
    %v1020 = vunpack.c.l.b16 %v770
    %v1021 = vunpack.c.h.b16 %v770
    %v1022 = vunpack.c.l.b16 %v771
    %v1023 = vunpack.c.h.b16 %v771
    %v1024 = vunpack.c.l.b16 %v772
    %v1025 = vunpack.c.h.b16 %v772
    %v1026 = vunpack.c.l.b16 %v773
    %v1027 = vunpack.c.h.b16 %v773
    %v1028 = vunpack.c.l.b16 %v774
    %v1029 = vunpack.c.h.b16 %v774
    %v1030 = vunpack.c.l.b16 %v775
    %v1031 = vunpack.c.h.b16 %v775
    %v1032 = vunpack.c.l.b16 %v776
    %v1033 = vunpack.c.h.b16 %v776
    %v1034 = vunpack.c.l.b16 %v777
    %v1035 = vunpack.c.h.b16 %v777
    %v1036 = vunpack.c.l.b16 %v778
    %v1037 = vunpack.c.h.b16 %v778
    %v1038 = vunpack.c.l.b16 %v779
    %v1039 = vunpack.c.h.b16 %v779
    %v1040 = vunpack.c.l.b16 %v780
    %v1041 = vunpack.c.h.b16 %v780
    %v1042 = vunpack.c.l.b16 %v781
    %v1043 = vunpack.c.h.b16 %v781
    %v1044 = vunpack.c.l.b16 %v782
    %v1045 = vunpack.c.h.b16 %v782
    %v1046 = vunpack.c.l.b16 %v783
    %v1047 = vunpack.c.h.b16 %v783
    %v1048 = vunpack.c.l.b16 %v784
    %v1049 = vunpack.c.h.b16 %v784
    %v1050 = vunpack.c.l.b16 %v785
    %v1051 = vunpack.c.h.b16 %v785
    %v1052 = vunpack.c.l.b16 %v786
    %v1053 = vunpack.c.h.b16 %v786
    %v1054 = vunpack.c.l.b16 %v787
    %v1055 = vunpack.c.h.b16 %v787
    %v1056 = vunpack.c.l.b16 %v788
    %v1057 = vunpack.c.h.b16 %v788
    %v1058 = vunpack.c.l.b16 %v789
    %v1059 = vunpack.c.h.b16 %v789
    %v1060 = vunpack.c.l.b16 %v790
    %v1061 = vunpack.c.h.b16 %v790
    %v1062 = vunpack.c.l.b16 %v791
    %v1063 = vunpack.c.h.b16 %v791
    %v1064 = vunpack.c.l.b16 %v792
    %v1065 = vunpack.c.h.b16 %v792
    %v1066 = vunpack.c.l.b16 %v793
    %v1067 = vunpack.c.h.b16 %v793
    %v1068 = vunpack.c.l.b16 %v794
    %v1069 = vunpack.c.h.b16 %v794
    %v1070 = vunpack.c.l.b16 %v795
    %v1071 = vunpack.c.h.b16 %v795
    %v1072 = vunpack.c.l.b16 %v796
    %v1073 = vunpack.c.h.b16 %v796
    %v1074 = vunpack.c.l.b16 %v797
    %v1075 = vunpack.c.h.b16 %v797
    %v1076 = vunpack.c.l.b16 %v798
    %v1077 = vunpack.c.h.b16 %v798
    %v1078 = vunpack.c.l.b16 %v799
    %v1079 = vunpack.c.h.b16 %v799
    %v1080 = vunpack.c.l.b16 %v800
    %v1081 = vunpack.c.h.b16 %v800
    %v1082 = vunpack.c.l.b16 %v801
    %v1083 = vunpack.c.h.b16 %v801
    %v1084 = vunpack.c.l.b16 %v802
    %v1085 = vunpack.c.h.b16 %v802
    %v1086 = vunpack.c.l.b16 %v803
    %v1087 = vunpack.c.h.b16 %v803
    %v1088 = vunpack.c.l.b16 %v804
    %v1089 = vunpack.c.h.b16 %v804
    %v1090 = vunpack.c.l.b16 %v805
    %v1091 = vunpack.c.h.b16 %v805
    %v1092 = vunpack.c.l.b16 %v806
    %v1093 = vunpack.c.h.b16 %v806
    %v1094 = vunpack.c.l.b16 %v807
    %v1095 = vunpack.c.h.b16 %v807
    %v1096 = vunpack.c.l.b16 %v808
    %v1097 = vunpack.c.h.b16 %v808
    %v1098 = vunpack.c.l.b16 %v809
    %v1099 = vunpack.c.h.b16 %v809
    %v1100 = vunpack.c.l.b16 %v810
    %v1101 = vunpack.c.h.b16 %v810
    %v1102 = vunpack.c.l.b16 %v811
    %v1103 = vunpack.c.h.b16 %v811
    %v1104 = vunpack.c.l.b16 %v812
    %v1105 = vunpack.c.h.b16 %v812
    %v1106 = vunpack.c.l.b16 %v813
    %v1107 = vunpack.c.h.b16 %v813
    %v1108 = vunpack.c.l.b16 %v814
    %v1109 = vunpack.c.h.b16 %v814
    %v1110 = vunpack.c.l.b16 %v815
    %v1111 = vunpack.c.h.b16 %v815
    %v1112 = vunpack.c.l.b16 %v816
    %v1113 = vunpack.c.h.b16 %v816
    %v1114 = vunpack.c.l.b16 %v817
    %v1115 = vunpack.c.h.b16 %v817
    %v1116 = vunpack.c.l.b16 %v818
    %v1117 = vunpack.c.h.b16 %v818
    %v1118 = vunpack.c.l.b16 %v819
    %v1119 = vunpack.c.h.b16 %v819
    %v1120 = vunpack.c.l.b16 %v820
    %v1121 = vunpack.c.h.b16 %v820
    %v1122 = vunpack.c.l.b16 %v821
    %v1123 = vunpack.c.h.b16 %v821
    %v1124 = vunpack.c.l.b16 %v822
    %v1125 = vunpack.c.h.b16 %v822
    %v1126 = vunpack.c.l.b16 %v823
    %v1127 = vunpack.c.h.b16 %v823
    %v1128 = vunpack.c.l.b16 %v824
    %v1129 = vunpack.c.h.b16 %v824
    %v1130 = vunpack.c.l.b16 %v825
    %v1131 = vunpack.c.h.b16 %v825
    %v1132 = vpack.c.b16 %v938, %v936
    %v1133 = vpack.c.b16 %v939, %v937
    %v1134 = vpack.c.b16 %v942, %v940
    %v1135 = vpack.c.b16 %v943, %v941
    %v1136 = vpack.c.b16 %v946, %v944
    %v1137 = vpack.c.b16 %v947, %v945
    %v1138 = vpack.c.b16 %v950, %v948
    %v1139 = vpack.c.b16 %v951, %v949
    %v1140 = vpack.c.b16 %v954, %v952
    %v1141 = vpack.c.b16 %v955, %v953
    %v1142 = vpack.c.b16 %v958, %v956
    %v1143 = vpack.c.b16 %v959, %v957
    %v1144 = vpack.c.b16 %v962, %v960
    %v1145 = vpack.c.b16 %v963, %v961
    %v1146 = vpack.c.b16 %v966, %v964
    %v1147 = vpack.c.b16 %v967, %v965
    %v1148 = vpack.c.b16 %v970, %v968
    %v1149 = vpack.c.b16 %v971, %v969
    %v1150 = vpack.c.b16 %v974, %v972
    %v1151 = vpack.c.b16 %v975, %v973
    %v1152 = vpack.c.b16 %v978, %v976
    %v1153 = vpack.c.b16 %v979, %v977
    %v1154 = vpack.c.b16 %v982, %v980
    %v1155 = vpack.c.b16 %v983, %v981
    %v1156 = vpack.c.b16 %v986, %v984
    %v1157 = vpack.c.b16 %v987, %v985
    %v1158 = vpack.c.b16 %v990, %v988
    %v1159 = vpack.c.b16 %v991, %v989
    %v1160 = vpack.c.b16 %v994, %v992
    %v1161 = vpack.c.b16 %v995, %v993
    %v1162 = vpack.c.b16 %v998, %v996
    %v1163 = vpack.c.b16 %v999, %v997
    %v1164 = vpack.c.b16 %v1002, %v1000
    %v1165 = vpack.c.b16 %v1003, %v1001
    %v1166 = vpack.c.b16 %v1006, %v1004
    %v1167 = vpack.c.b16 %v1007, %v1005
    %v1168 = vpack.c.b16 %v1010, %v1008
    %v1169 = vpack.c.b16 %v1011, %v1009
    %v1170 = vpack.c.b16 %v1014, %v1012
    %v1171 = vpack.c.b16 %v1015, %v1013
    %v1172 = vpack.c.b16 %v1018, %v1016
    %v1173 = vpack.c.b16 %v1019, %v1017
    %v1174 = vpack.c.b16 %v1022, %v1020
    %v1175 = vpack.c.b16 %v1023, %v1021
    %v1176 = vpack.c.b16 %v1026, %v1024
    %v1177 = vpack.c.b16 %v1027, %v1025
    %v1178 = vpack.c.b16 %v1030, %v1028
    %v1179 = vpack.c.b16 %v1031, %v1029
    %v1180 = vpack.c.b16 %v1034, %v1032
    %v1181 = vpack.c.b16 %v1035, %v1033
    %v1182 = vpack.c.b16 %v1038, %v1036
    %v1183 = vpack.c.b16 %v1039, %v1037
    %v1184 = vpack.c.b16 %v1042, %v1040
    %v1185 = vpack.c.b16 %v1043, %v1041
    %v1186 = vpack.c.b16 %v1046, %v1044
    %v1187 = vpack.c.b16 %v1047, %v1045
    %v1188 = vpack.c.b16 %v1050, %v1048
    %v1189 = vpack.c.b16 %v1051, %v1049
    %v1190 = vpack.c.b16 %v1054, %v1052
    %v1191 = vpack.c.b16 %v1055, %v1053
    %v1192 = vpack.c.b16 %v1058, %v1056
    %v1193 = vpack.c.b16 %v1059, %v1057
    %v1194 = vpack.c.b16 %v1062, %v1060
    %v1195 = vpack.c.b16 %v1063, %v1061
    %v1196 = vpack.c.b16 %v1066, %v1064
    %v1197 = vpack.c.b16 %v1067, %v1065
    %v1198 = vpack.c.b16 %v1070, %v1068
    %v1199 = vpack.c.b16 %v1071, %v1069
    %v1200 = vpack.c.b16 %v1074, %v1072
    %v1201 = vpack.c.b16 %v1075, %v1073
    %v1202 = vpack.c.b16 %v1078, %v1076
    %v1203 = vpack.c.b16 %v1079, %v1077
    %v1204 = vpack.c.b16 %v1082, %v1080
    %v1205 = vpack.c.b16 %v1083, %v1081
    %v1206 = vpack.c.b16 %v1086, %v1084
    %v1207 = vpack.c.b16 %v1087, %v1085
    %v1208 = vpack.c.b16 %v1090, %v1088
    %v1209 = vpack.c.b16 %v1091, %v1089
    %v1210 = vpack.c.b16 %v1094, %v1092
    %v1211 = vpack.c.b16 %v1095, %v1093
    %v1212 = vpack.c.b16 %v1098, %v1096
    %v1213 = vpack.c.b16 %v1099, %v1097
    %v1214 = vpack.c.b16 %v1102, %v1100
    %v1215 = vpack.c.b16 %v1103, %v1101
    %v1216 = vpack.c.b16 %v1106, %v1104
    %v1217 = vpack.c.b16 %v1107, %v1105
    %v1218 = vpack.c.b16 %v1110, %v1108
    %v1219 = vpack.c.b16 %v1111, %v1109
    %v1220 = vpack.c.b16 %v1114, %v1112
    %v1221 = vpack.c.b16 %v1115, %v1113
    %v1222 = vpack.c.b16 %v1118, %v1116
    %v1223 = vpack.c.b16 %v1119, %v1117
    %v1224 = vpack.c.b16 %v1122, %v1120
    %v1225 = vpack.c.b16 %v1123, %v1121
    %v1226 = vpack.c.b16 %v1126, %v1124
    %v1227 = vpack.c.b16 %v1127, %v1125
    %v1228 = vpack.c.b16 %v1130, %v1128
    %v1229 = vpack.c.b16 %v1131, %v1129
    %vm1328 = vcmask 130048
    %v1330 = vsel %vm1328, %v727, 0
    %1332 = vmatprep.subr.bf16.mxu0 %v1133
    %1333 = vmatpush1.bf16.msra.mxu0 %v1132
    %1334 = vmatprep.subr.bf16.mxu0 %v1135
    %1335 = vmatpush1.bf16.msra.mxu0 %v1134
    %1336 = vmatprep.subr.bf16.mxu0 %v1137
    %1337 = vmatpush1.bf16.msra.mxu0 %v1136
    %1338 = vmatprep.subr.bf16.mxu0 %v1139
    %1339 = vmatpush1.bf16.msra.mxu0 %v1138
    %1340 = vmatprep.subr.bf16.mxu0 %v1141
    %1341 = vmatpush1.bf16.msra.mxu0 %v1140
    %1342 = vmatprep.subr.bf16.mxu0 %v1143
    %1343 = vmatpush1.bf16.msra.mxu0 %v1142
    %1344 = vmatprep.subr.bf16.mxu0 %v1145
    %1345 = vmatpush1.bf16.msra.mxu0 %v1144
    %1346 = vmatprep.subr.bf16.mxu0 %v1147
    %1347 = vmatpush1.bf16.msra.mxu0 %v1146
    %1348 = vmatprep.subr.bf16.mxu0 %v1149
    %1349 = vmatpush1.bf16.msra.mxu0 %v1148
    %1350 = vmatprep.subr.bf16.mxu0 %v1151
    %1351 = vmatpush1.bf16.msra.mxu0 %v1150
    %1352 = vmatprep.subr.bf16.mxu0 %v1153
    %1353 = vmatpush1.bf16.msra.mxu0 %v1152
    %1354 = vmatprep.subr.bf16.mxu0 %v1155
    %1355 = vmatpush1.bf16.msra.mxu0 %v1154
    %1356 = vmatprep.subr.bf16.mxu0 %v1157
    %1357 = vmatpush1.bf16.msra.mxu0 %v1156
    %1358 = vmatprep.subr.bf16.mxu0 %v1159
    %1359 = vmatpush1.bf16.msra.mxu0 %v1158
    %1360 = vmatprep.subr.bf16.mxu0 %v1161
    %1361 = vmatpush1.bf16.msra.mxu0 %v1160
    %1362 = vmatprep.subr.bf16.mxu0 %v1163
    %1363 = vmatpush1.bf16.msra.mxu0 %v1162
    %1364 = vmatprep.mubr.bf16.mxu0 %v722
    %1365 = vmatmul.mubr.bf16.gmra.mrb[0].mxu0 %v721
    %v1366 = vpop.f32.mrb[0].mxu0
    %v1367 = vadd.f32 %v831, %v1366
    %v1368 = vpop.f32.mrb[0].mxu0
    %v1369 = vadd.f32 %v835, %v1368
    %v1370 = vpop.f32.mrb[0].mxu0
    %v1371 = vpop.f32.mrb[0].mxu0
    %1372 = vdwg.mxu0
    %1373 = vmatprep.subr.bf16.mxu0 %v1165
    %1374 = vmatpush1.bf16.msra.mxu0 %v1164
    %1375 = vmatprep.subr.bf16.mxu0 %v1167
    %1376 = vmatpush1.bf16.msra.mxu0 %v1166
    %1377 = vmatprep.subr.bf16.mxu0 %v1169
    %1378 = vmatpush1.bf16.msra.mxu0 %v1168
    %1379 = vmatprep.subr.bf16.mxu0 %v1171
    %1380 = vmatpush1.bf16.msra.mxu0 %v1170
    %1381 = vmatprep.subr.bf16.mxu0 %v1173
    %1382 = vmatpush1.bf16.msra.mxu0 %v1172
    %1383 = vmatprep.subr.bf16.mxu0 %v1175
    %1384 = vmatpush1.bf16.msra.mxu0 %v1174
    %1385 = vmatprep.subr.bf16.mxu0 %v1177
    %1386 = vmatpush1.bf16.msra.mxu0 %v1176
    %1387 = vmatprep.subr.bf16.mxu0 %v1179
    %1388 = vmatpush1.bf16.msra.mxu0 %v1178
    %1389 = vmatprep.subr.bf16.mxu0 %v1181
    %1390 = vmatpush1.bf16.msra.mxu0 %v1180
    %1391 = vmatprep.subr.bf16.mxu0 %v1183
    %1392 = vmatpush1.bf16.msra.mxu0 %v1182
    %1393 = vmatprep.subr.bf16.mxu0 %v1185
    %1394 = vmatpush1.bf16.msra.mxu0 %v1184
    %1395 = vmatprep.subr.bf16.mxu0 %v1187
    %1396 = vmatpush1.bf16.msra.mxu0 %v1186
    %1397 = vmatprep.subr.bf16.mxu0 %v1189
    %1398 = vmatpush1.bf16.msra.mxu0 %v1188
    %1399 = vmatprep.subr.bf16.mxu0 %v1191
    %1400 = vmatpush1.bf16.msra.mxu0 %v1190
    %1401 = vmatprep.subr.bf16.mxu0 %v1193
    %1402 = vmatpush1.bf16.msra.mxu0 %v1192
    %1403 = vmatprep.subr.bf16.mxu0 %v1195
    %1404 = vmatpush1.bf16.msra.mxu0 %v1194
    %1405 = vmatprep.mubr.bf16.mxu0 %v724
    %1406 = vmatmul.mubr.bf16.gmra.mrb[0].mxu0 %v723
    %v1407 = vpop.f32.mrb[0].mxu0
    %v1408 = vadd.f32 %v1367, %v1407
    %v1409 = vpop.f32.mrb[0].mxu0
    %v1410 = vadd.f32 %v1369, %v1409
    %v1411 = vpop.f32.mrb[0].mxu0
    %v1412 = vpop.f32.mrb[0].mxu0
    %1413 = vdwg.mxu0
    %1414 = vmatprep.subr.bf16.mxu0 %v1197
    %1415 = vmatpush1.bf16.msra.mxu0 %v1196
    %1416 = vmatprep.subr.bf16.mxu0 %v1199
    %1417 = vmatpush1.bf16.msra.mxu0 %v1198
    %1418 = vmatprep.subr.bf16.mxu0 %v1201
    %1419 = vmatpush1.bf16.msra.mxu0 %v1200
    %1420 = vmatprep.subr.bf16.mxu0 %v1203
    %1421 = vmatpush1.bf16.msra.mxu0 %v1202
    %1422 = vmatprep.subr.bf16.mxu0 %v1205
    %1423 = vmatpush1.bf16.msra.mxu0 %v1204
    %1424 = vmatprep.subr.bf16.mxu0 %v1207
    %1425 = vmatpush1.bf16.msra.mxu0 %v1206
    %1426 = vmatprep.subr.bf16.mxu0 %v1209
    %1427 = vmatpush1.bf16.msra.mxu0 %v1208
    %1428 = vmatprep.subr.bf16.mxu0 %v1211
    %1429 = vmatpush1.bf16.msra.mxu0 %v1210
    %1430 = vmatprep.subr.bf16.mxu0 %v1213
    %1431 = vmatpush1.bf16.msra.mxu0 %v1212
    %1432 = vmatprep.subr.bf16.mxu0 %v1215
    %1433 = vmatpush1.bf16.msra.mxu0 %v1214
    %1434 = vmatprep.subr.bf16.mxu0 %v1217
    %1435 = vmatpush1.bf16.msra.mxu0 %v1216
    %1436 = vmatprep.subr.bf16.mxu0 %v1219
    %1437 = vmatpush1.bf16.msra.mxu0 %v1218
    %1438 = vmatprep.subr.bf16.mxu0 %v1221
    %1439 = vmatpush1.bf16.msra.mxu0 %v1220
    %1440 = vmatprep.subr.bf16.mxu0 %v1223
    %1441 = vmatpush1.bf16.msra.mxu0 %v1222
    %1442 = vmatprep.subr.bf16.mxu0 %v1225
    %1443 = vmatpush1.bf16.msra.mxu0 %v1224
    %1444 = vmatprep.subr.bf16.mxu0 %v1227
    %1445 = vmatpush1.bf16.msra.mxu0 %v1226
    %1446 = vmatprep.mubr.bf16.mxu0 %v726
    %1447 = vmatmul.mubr.bf16.gmra.mrb[0].mxu0 %v725
    %v1448 = vpop.f32.mrb[0].mxu0
    %v1449 = vadd.f32 %v1408, %v1448
    %v1450 = vpop.f32.mrb[0].mxu0
    %v1451 = vadd.f32 %v1410, %v1450
    %v1452 = vpop.f32.mrb[0].mxu0
    %v1453 = vpop.f32.mrb[0].mxu0
    %1454 = vdwg.mxu0
    %1455 = vmatprep.subr.bf16.mxu0 %v1229
    %1456 = vmatpush1.bf16.msra.mxu0 %v1228
    %1457 = vmatprep.subr.bf16.mxu0 0
    %1458 = vmatpush1.bf16.msra.mxu0 0
    %1459 = vmatprep.subr.bf16.mxu0 0
    %1460 = vmatpush1.bf16.msra.mxu0 0
    %1461 = vmatprep.subr.bf16.mxu0 0
    %1462 = vmatpush1.bf16.msra.mxu0 0
    %1463 = vmatprep.subr.bf16.mxu0 0
    %1464 = vmatpush1.bf16.msra.mxu0 0
    %1465 = vmatprep.subr.bf16.mxu0 0
    %1466 = vmatpush1.bf16.msra.mxu0 0
    %1467 = vmatprep.subr.bf16.mxu0 0
    %1468 = vmatpush1.bf16.msra.mxu0 0
    %1469 = vmatprep.subr.bf16.mxu0 0
    %1470 = vmatpush1.bf16.msra.mxu0 0
    %1471 = vmatprep.subr.bf16.mxu0 0
    %1472 = vmatpush1.bf16.msra.mxu0 0
    %1473 = vmatprep.subr.bf16.mxu0 0
    %1474 = vmatpush1.bf16.msra.mxu0 0
    %1475 = vmatprep.subr.bf16.mxu0 0
    %1476 = vmatpush1.bf16.msra.mxu0 0
    %1477 = vmatprep.subr.bf16.mxu0 0
    %1478 = vmatpush1.bf16.msra.mxu0 0
    %1479 = vmatprep.subr.bf16.mxu0 0
    %1480 = vmatpush1.bf16.msra.mxu0 0
    %1481 = vmatprep.subr.bf16.mxu0 0
    %1482 = vmatpush1.bf16.msra.mxu0 0
    %1483 = vmatprep.subr.bf16.mxu0 0
    %1484 = vmatpush1.bf16.msra.mxu0 0
    %1485 = vmatprep.subr.bf16.mxu0 0
    %1486 = vmatpush1.bf16.msra.mxu0 0
    %1487 = vmatprep.mubr.bf16.mxu0 0
    %1488 = vmatmul.mubr.bf16.gmra.mrb[0].mxu0 %v1330
    %v1489 = vpop.f32.mrb[0].mxu0
    %v1490 = vadd.f32 %v1449, %v1489
    %v1491 = vpop.f32.mrb[0].mxu0
    %v1492 = vadd.f32 %v1451, %v1491
    %v1493 = vpop.f32.mrb[0].mxu0
    %v1494 = vpop.f32.mrb[0].mxu0
    %1495 = vdwg.mxu0
    %v1496 = vmax.f32 %v1490, -0.5
    %v1497 = vmax.f32 %v1492, -0.5
    %v1498 = vmin.f32 %v1496, 0.5
    %v1499 = vmin.f32 %v1497, 0.5
    %v1500 = vsub.f32 %v1490, %v1498
    %v1501 = vsub.f32 %v1492, %v1499
    %s1502 = smul.u32 4, 32
    %s1503 = smul.u32 %s1502, 5
    %s1504 = sshll.u32 %s1503, 4
    %1505 = dma.done [#allocation3], %s1504
    %v1506 = vpack.c.bf16 %v1500, %v1500
    %v1507 = vpack.c.bf16 %v1501, %v1501
    %v1508 = vld [vmem:[#allocation2] sm:$0xff]
    %v1509 = vld [vmem:[#allocation2 + $0x8] sm:$0xff]
    %v1510 = vld [vmem:[#allocation2 + $0x28] sm:$0xff]
    %v1511 = vld [vmem:[#allocation2 + $0x30] sm:$0xff]
    %v1512 = vld [vmem:[#allocation2 + $0x50] sm:$0xff]
    %v1513 = vld [vmem:[#allocation2 + $0x58] sm:$0xff]
    %v1514 = vld [vmem:[#allocation2 + $0x78] sm:$0xff]
    %v1515 = vld [vmem:[#allocation2 + $0x80] sm:$0xff]
    %v1516 = vld [vmem:[#allocation2 + $0xa0] sm:$0xff]
    %v1517 = vld [vmem:[#allocation2 + $0xa8] sm:$0xff]
    %v1518 = vld [vmem:[#allocation2 + $0xc8] sm:$0xff]
    %v1519 = vld [vmem:[#allocation2 + $0xd0] sm:$0xff]
    %v1520 = vld [vmem:[#allocation2 + $0xf0] sm:$0xff]
    %v1521 = vld [vmem:[#allocation2 + $0xf8] sm:$0xff]
    %v1522 = vld [vmem:[#allocation2 + $0x118] sm:$0xff]
    %v1523 = vld [vmem:[#allocation2 + $0x120] sm:$0xff]
    %v1524 = vld [vmem:[#allocation2 + $0x140] sm:$0xff]
    %v1525 = vld [vmem:[#allocation2 + $0x148] sm:$0xff]
    %v1526 = vld [vmem:[#allocation2 + $0x168] sm:$0xff]
    %v1527 = vld [vmem:[#allocation2 + $0x170] sm:$0xff]
    %v1528 = vld [vmem:[#allocation2 + $0x190] sm:$0xff]
    %v1529 = vld [vmem:[#allocation2 + $0x198] sm:$0xff]
    %v1530 = vld [vmem:[#allocation2 + $0x1b8] sm:$0xff]
    %v1531 = vld [vmem:[#allocation2 + $0x1c0] sm:$0xff]
    %v1532 = vld [vmem:[#allocation2 + $0x1e0] sm:$0xff]
    %v1533 = vld [vmem:[#allocation2 + $0x1e8] sm:$0xff]
    %v1534 = vld [vmem:[#allocation2 + $0x208] sm:$0xff]
    %v1535 = vld [vmem:[#allocation2 + $0x210] sm:$0xff]
    %v1536 = vld [vmem:[#allocation2 + $0x230] sm:$0xff]
    %v1537 = vld [vmem:[#allocation2 + $0x238] sm:$0xff]
    %v1538 = vld [vmem:[#allocation2 + $0x258] sm:$0xff]
    %v1539 = vld [vmem:[#allocation2 + $0x260] sm:$0xff]
    %v1540 = vld [vmem:[%s3] sm:$0x3]
    %v1542 = vlaneseq
    %v1543 = vshrl.u32 %v1542, 7
    %v1544 = vsub.s32 0, %v1543
    %v1545 = vrot.slane %v1540, %v1544
    %v1546 = vlaneseq
    %v1547 = vshrl.u32 %v1546, 7
    %v1548 = vsub.s32 1, %v1547
    %v1549 = vrot.slane %v1540, %v1548
    %1552 = vmatprep.subr.bf16.mxu0 %v1509
    %1553 = vmatpush1.bf16.msra.mxu0 %v1508
    %1554 = vmatprep.subr.bf16.mxu0 %v1511
    %1555 = vmatpush1.bf16.msra.mxu0 %v1510
    %1556 = vmatprep.subr.bf16.mxu0 %v1513
    %1557 = vmatpush1.bf16.msra.mxu0 %v1512
    %1558 = vmatprep.subr.bf16.mxu0 %v1515
    %1559 = vmatpush1.bf16.msra.mxu0 %v1514
    %1560 = vmatprep.subr.bf16.mxu0 %v1517
    %1561 = vmatpush1.bf16.msra.mxu0 %v1516
    %1562 = vmatprep.subr.bf16.mxu0 %v1519
    %1563 = vmatpush1.bf16.msra.mxu0 %v1518
    %1564 = vmatprep.subr.bf16.mxu0 %v1521
    %1565 = vmatpush1.bf16.msra.mxu0 %v1520
    %1566 = vmatprep.subr.bf16.mxu0 %v1523
    %1567 = vmatpush1.bf16.msra.mxu0 %v1522
    %1568 = vmatprep.subr.bf16.mxu0 %v1525
    %1569 = vmatpush1.bf16.msra.mxu0 %v1524
    %1570 = vmatprep.subr.bf16.mxu0 %v1527
    %1571 = vmatpush1.bf16.msra.mxu0 %v1526
    %1572 = vmatprep.subr.bf16.mxu0 %v1529
    %1573 = vmatpush1.bf16.msra.mxu0 %v1528
    %1574 = vmatprep.subr.bf16.mxu0 %v1531
    %1575 = vmatpush1.bf16.msra.mxu0 %v1530
    %1576 = vmatprep.subr.bf16.mxu0 %v1533
    %1577 = vmatpush1.bf16.msra.mxu0 %v1532
    %1578 = vmatprep.subr.bf16.mxu0 %v1535
    %1579 = vmatpush1.bf16.msra.mxu0 %v1534
    %1580 = vmatprep.subr.bf16.mxu0 %v1537
    %1581 = vmatpush1.bf16.msra.mxu0 %v1536
    %1582 = vmatprep.subr.bf16.mxu0 %v1539
    %1583 = vmatpush1.bf16.msra.mxu0 %v1538
    %1584 = vmatprep.mubr.bf16.mxu0 %v1507
    %1585 = vmatmul.mubr.bf16.gmra.mrb[0].mxu0 %v1506
    %v1586 = vpop.f32.mrb[0].mxu0
    %v1587 = vadd.f32 %v1545, %v1586
    %v1588 = vpop.f32.mrb[0].mxu0
    %v1589 = vadd.f32 %v1549, %v1588
    %v1590 = vpop.f32.mrb[0].mxu0
    %v1591 = vpop.f32.mrb[0].mxu0
    %1592 = vdwg.mxu0
    %v1593 = vmax.f32 %v1587, -0.5
    %v1594 = vmax.f32 %v1589, -0.5
    %v1595 = vmin.f32 %v1593, 0.5
    %v1596 = vmin.f32 %v1594, 0.5
    %v1597 = vsub.f32 %v1587, %v1595
    %v1598 = vsub.f32 %v1589, %v1596
    %v1599 = vpack.c.bf16 %v1597, %v1597
    %v1600 = vpack.c.bf16 %v1598, %v1598
    %v1601 = vld [vmem:[#allocation2 + $0x10] sm:$0xff]
    %v1602 = vld [vmem:[#allocation2 + $0x18] sm:$0xff]
    %v1603 = vld [vmem:[#allocation2 + $0x38] sm:$0xff]
    %v1604 = vld [vmem:[#allocation2 + $0x40] sm:$0xff]
    %v1605 = vld [vmem:[#allocation2 + $0x60] sm:$0xff]
    %v1606 = vld [vmem:[#allocation2 + $0x68] sm:$0xff]
    %v1607 = vld [vmem:[#allocation2 + $0x88] sm:$0xff]
    %v1608 = vld [vmem:[#allocation2 + $0x90] sm:$0xff]
    %v1609 = vld [vmem:[#allocation2 + $0xb0] sm:$0xff]
    %v1610 = vld [vmem:[#allocation2 + $0xb8] sm:$0xff]
    %v1611 = vld [vmem:[#allocation2 + $0xd8] sm:$0xff]
    %v1612 = vld [vmem:[#allocation2 + $0xe0] sm:$0xff]
    %v1613 = vld [vmem:[#allocation2 + $0x100] sm:$0xff]
    %v1614 = vld [vmem:[#allocation2 + $0x108] sm:$0xff]
    %v1615 = vld [vmem:[#allocation2 + $0x128] sm:$0xff]
    %v1616 = vld [vmem:[#allocation2 + $0x130] sm:$0xff]
    %v1617 = vld [vmem:[#allocation2 + $0x150] sm:$0xff]
    %v1618 = vld [vmem:[#allocation2 + $0x158] sm:$0xff]
    %v1619 = vld [vmem:[#allocation2 + $0x178] sm:$0xff]
    %v1620 = vld [vmem:[#allocation2 + $0x180] sm:$0xff]
    %v1621 = vld [vmem:[#allocation2 + $0x1a0] sm:$0xff]
    %v1622 = vld [vmem:[#allocation2 + $0x1a8] sm:$0xff]
    %v1623 = vld [vmem:[#allocation2 + $0x1c8] sm:$0xff]
    %v1624 = vld [vmem:[#allocation2 + $0x1d0] sm:$0xff]
    %v1625 = vld [vmem:[#allocation2 + $0x1f0] sm:$0xff]
    %v1626 = vld [vmem:[#allocation2 + $0x1f8] sm:$0xff]
    %v1627 = vld [vmem:[#allocation2 + $0x218] sm:$0xff]
    %v1628 = vld [vmem:[#allocation2 + $0x220] sm:$0xff]
    %v1629 = vld [vmem:[#allocation2 + $0x240] sm:$0xff]
    %v1630 = vld [vmem:[#allocation2 + $0x248] sm:$0xff]
    %v1631 = vld [vmem:[#allocation2 + $0x268] sm:$0xff]
    %v1632 = vld [vmem:[#allocation2 + $0x270] sm:$0xff]
    %v1633 = vld [vmem:[%s4] sm:$0x3]
    %v1635 = vlaneseq
    %v1636 = vshrl.u32 %v1635, 7
    %v1637 = vsub.s32 0, %v1636
    %v1638 = vrot.slane %v1633, %v1637
    %v1639 = vlaneseq
    %v1640 = vshrl.u32 %v1639, 7
    %v1641 = vsub.s32 1, %v1640
    %v1642 = vrot.slane %v1633, %v1641
    %1645 = vmatprep.subr.bf16.mxu0 %v1602
    %1646 = vmatpush1.bf16.msra.mxu0 %v1601
    %1647 = vmatprep.subr.bf16.mxu0 %v1604
    %1648 = vmatpush1.bf16.msra.mxu0 %v1603
    %1649 = vmatprep.subr.bf16.mxu0 %v1606
    %1650 = vmatpush1.bf16.msra.mxu0 %v1605
    %1651 = vmatprep.subr.bf16.mxu0 %v1608
    %1652 = vmatpush1.bf16.msra.mxu0 %v1607
    %1653 = vmatprep.subr.bf16.mxu0 %v1610
    %1654 = vmatpush1.bf16.msra.mxu0 %v1609
    %1655 = vmatprep.subr.bf16.mxu0 %v1612
    %1656 = vmatpush1.bf16.msra.mxu0 %v1611
    %1657 = vmatprep.subr.bf16.mxu0 %v1614
    %1658 = vmatpush1.bf16.msra.mxu0 %v1613
    %1659 = vmatprep.subr.bf16.mxu0 %v1616
    %1660 = vmatpush1.bf16.msra.mxu0 %v1615
    %1661 = vmatprep.subr.bf16.mxu0 %v1618
    %1662 = vmatpush1.bf16.msra.mxu0 %v1617
    %1663 = vmatprep.subr.bf16.mxu0 %v1620
    %1664 = vmatpush1.bf16.msra.mxu0 %v1619
    %1665 = vmatprep.subr.bf16.mxu0 %v1622
    %1666 = vmatpush1.bf16.msra.mxu0 %v1621
    %1667 = vmatprep.subr.bf16.mxu0 %v1624
    %1668 = vmatpush1.bf16.msra.mxu0 %v1623
    %1669 = vmatprep.subr.bf16.mxu0 %v1626
    %1670 = vmatpush1.bf16.msra.mxu0 %v1625
    %1671 = vmatprep.subr.bf16.mxu0 %v1628
    %1672 = vmatpush1.bf16.msra.mxu0 %v1627
    %1673 = vmatprep.subr.bf16.mxu0 %v1630
    %1674 = vmatpush1.bf16.msra.mxu0 %v1629
    %1675 = vmatprep.subr.bf16.mxu0 %v1632
    %1676 = vmatpush1.bf16.msra.mxu0 %v1631
    %1677 = vmatprep.mubr.bf16.mxu0 %v1600
    %1678 = vmatmul.mubr.bf16.gmra.mrb[0].mxu0 %v1599
    %v1679 = vpop.f32.mrb[0].mxu0
    %v1680 = vadd.f32 %v1638, %v1679
    %v1681 = vpop.f32.mrb[0].mxu0
    %v1682 = vadd.f32 %v1642, %v1681
    %v1683 = vpop.f32.mrb[0].mxu0
    %v1684 = vpop.f32.mrb[0].mxu0
    %1685 = vdwg.mxu0
    %v1686 = vmax.f32 %v1680, -0.5
    %v1687 = vmax.f32 %v1682, -0.5
    %v1688 = vmin.f32 %v1686, 0.5
    %v1689 = vmin.f32 %v1687, 0.5
    %v1690 = vsub.f32 %v1680, %v1688
    %v1691 = vsub.f32 %v1682, %v1689
    %v1692 = vpack.c.bf16 %v1690, %v1690
    %v1693 = vpack.c.bf16 %v1691, %v1691
    %v1694 = vld [vmem:[#allocation2 + $0x20] sm:$0xff]
    %v1695 = vld [vmem:[#allocation2 + $0x48] sm:$0xff]
    %v1696 = vld [vmem:[#allocation2 + $0x70] sm:$0xff]
    %v1697 = vld [vmem:[#allocation2 + $0x98] sm:$0xff]
    %v1698 = vld [vmem:[#allocation2 + $0xc0] sm:$0xff]
    %v1699 = vld [vmem:[#allocation2 + $0xe8] sm:$0xff]
    %v1700 = vld [vmem:[#allocation2 + $0x110] sm:$0xff]
    %v1701 = vld [vmem:[#allocation2 + $0x138] sm:$0xff]
    %v1702 = vld [vmem:[#allocation2 + $0x160] sm:$0xff]
    %v1703 = vld [vmem:[#allocation2 + $0x188] sm:$0xff]
    %v1704 = vld [vmem:[#allocation2 + $0x1b0] sm:$0xff]
    %v1705 = vld [vmem:[#allocation2 + $0x1d8] sm:$0xff]
    %v1706 = vld [vmem:[#allocation2 + $0x200] sm:$0xff]
    %v1707 = vld [vmem:[#allocation2 + $0x228] sm:$0xff]
    %v1708 = vld [vmem:[#allocation2 + $0x250] sm:$0xff]
    %v1709 = vld [vmem:[#allocation2 + $0x278] sm:$0xff]
    %v1710 = vld [vmem:[%s5] sm:$0x1]
    %v1712 = vlaneseq
    %v1713 = vshrl.u32 %v1712, 7
    %v1714 = vsub.s32 0, %v1713
    %v1715 = vrot.slane %v1710, %v1714
    %1717 = vmatprep.subr.bf16.mxu0 0
    %1718 = vmatpush1.bf16.msra.mxu0 %v1694
    %1719 = vmatprep.subr.bf16.mxu0 0
    %1720 = vmatpush1.bf16.msra.mxu0 %v1695
    %1721 = vmatprep.subr.bf16.mxu0 0
    %1722 = vmatpush1.bf16.msra.mxu0 %v1696
    %1723 = vmatprep.subr.bf16.mxu0 0
    %1724 = vmatpush1.bf16.msra.mxu0 %v1697
    %1725 = vmatprep.subr.bf16.mxu0 0
    %1726 = vmatpush1.bf16.msra.mxu0 %v1698
    %1727 = vmatprep.subr.bf16.mxu0 0
    %1728 = vmatpush1.bf16.msra.mxu0 %v1699
    %1729 = vmatprep.subr.bf16.mxu0 0
    %1730 = vmatpush1.bf16.msra.mxu0 %v1700
    %1731 = vmatprep.subr.bf16.mxu0 0
    %1732 = vmatpush1.bf16.msra.mxu0 %v1701
    %1733 = vmatprep.subr.bf16.mxu0 0
    %1734 = vmatpush1.bf16.msra.mxu0 %v1702
    %1735 = vmatprep.subr.bf16.mxu0 0
    %1736 = vmatpush1.bf16.msra.mxu0 %v1703
    %1737 = vmatprep.subr.bf16.mxu0 0
    %1738 = vmatpush1.bf16.msra.mxu0 %v1704
    %1739 = vmatprep.subr.bf16.mxu0 0
    %1740 = vmatpush1.bf16.msra.mxu0 %v1705
    %1741 = vmatprep.subr.bf16.mxu0 0
    %1742 = vmatpush1.bf16.msra.mxu0 %v1706
    %1743 = vmatprep.subr.bf16.mxu0 0
    %1744 = vmatpush1.bf16.msra.mxu0 %v1707
    %1745 = vmatprep.subr.bf16.mxu0 0
    %1746 = vmatpush1.bf16.msra.mxu0 %v1708
    %1747 = vmatprep.subr.bf16.mxu0 0
    %1748 = vmatpush1.bf16.msra.mxu0 %v1709
    %1749 = vmatprep.mubr.bf16.mxu0 %v1693
    %1750 = vmatmul.mubr.bf16.gmra.mrb[0].mxu0 %v1692
    %v1751 = vpop.f32.mrb[0].mxu0
    %v1752 = vadd.f32 %v1715, %v1751
    %v1753 = vpop.f32.mrb[0].mxu0
    %v1754 = vpop.f32.mrb[0].mxu0
    %v1755 = vpop.f32.mrb[0].mxu0
    %1756 = vdwg.mxu0
    %1757 = vst [vmem:[#allocation4] sm:$0xff] %v1752
    // Predicated region
    $region63: #{forward.1} parent=1 // pred_check
      _
    $region64: #{forward.1} parent=1 // pred_check_branch
      %1759 = sbr.rel (0) target = $region66
    $region65: #{forward.1} parent=1 // pred_region
      %s1761 = ssub.s32 128, 128
      %1762 = vsyncadd [#allocation5], %s1761
      %s1764 = sshll.u32 [#allocation4], 4
      %s1765 = int_to_ptr.vmem [resolvable:$true] %s1764
      %1767 = dma.vmem_to_hbm [thread:$0]  %s1765, 128, %s7, [#allocation5]
    $region66: #{forward.1} parent=1 // pred_fallthru
      _
    // Predicated region
    $region67: #{forward.1} parent=1 // pred_check
      _
    $region68: #{forward.1} parent=1 // pred_check_branch
      %1769 = sbr.rel (0) target = $region70
    $region69: #{forward.1} parent=1 // pred_region
      %1770 = dma.done [#allocation5], 128
    $region70: #{forward.1} parent=1 // pred_fallthru
      _
    %1771 = vsyncpa [#allocation5], 1
  %1772 = vsyncmov [#allocation3]
  %s1773 = vpop.sfrf %1772
  %p1774 = scmp.eq.s32.totalorder %s1773, 0
  %p1775 = pneg %p1774
  %1777 = shalt.err (%p1775)

</llo_original>
